<compile_context>
chip_gen: v6e
topology: v6e:2x2x1
jax: 0.10.0
libtpu: 0.0.40
codegen_flags: <defaults>
</compile_context>

<pallas_src>
import functools
import math

import jax
import jax.numpy as jnp
from jax.experimental import pallas as pl
from jax.experimental.pallas import tpu as pltpu

NUM_HEADS = 4
_VMEM_LIMIT = 48 * 1024 * 1024   # fits v5e/v6e (128 MiB) and v7x (64 MiB) physical VMEM


# ------------------------------ tile helpers --------------------------------

def _pick_tile(n, target, unit):
    """Largest divisor of n that is a multiple of `unit` and <= target.

    n <= target returns the full extent.  Falls back to the full extent (always a legal
    block) only when n has no unit-aligned divisor <= target (awkward/odd n)."""
    if n <= target:
        return n
    t = (target // unit) * unit
    while t >= unit:
        if n % t == 0:
            return t
        t -= unit
    return n


def _pick_q_tile(S, dk):
    """Query tile for the attention grid: bounds the (tq, dk, S) rel blocks / temporaries."""
    budget = 4 * 1024 * 1024                       # ~4 MiB per f32 (tq, dk, S) temporary
    cap = max(8, budget // max(1, dk * S * 4))
    target = max(8, min(128, (cap // 8) * 8))
    return _pick_tile(S, target, 8)


# ------------------------------ Pallas kernels -------------------------------

def _ln_linear_kernel(x_ref, g_ref, b_ref, w_ref, bias_ref, o_ref, xn_ref, *, eps, relu):
    # LayerNorm is computed once per row tile (j == 0) into a bf16 scratch and reused for
    # every N tile (the x block index is constant over j, so the block stays resident).
    @pl.when(pl.program_id(1) == 0)
    def _():
        x = x_ref[...].astype(jnp.float32)
        mean = jnp.mean(x, axis=-1, keepdims=True)
        var = jnp.mean((x - mean) ** 2, axis=-1, keepdims=True)
        xn = (x - mean) * jax.lax.rsqrt(var + eps)
        xn_ref[...] = (xn * g_ref[...] + b_ref[...]).astype(xn_ref.dtype)

    y = jnp.dot(xn_ref[...], w_ref[...], preferred_element_type=jnp.float32)
    y = y + bias_ref[...]
    if relu:
        y = jnp.maximum(y, 0.0)
    o_ref[...] = y.astype(o_ref.dtype)


def ln_linear(x, g, b, w, bias, relu=False, out_dtype=None, eps=1e-5):
    """layernorm(x) @ w + bias.  x: (M, K) f32, w: (K, N) bf16, bias: (1, N) -> (M, N)."""
    M, K = x.shape
    N = w.shape[1]
    out_dtype = out_dtype or x.dtype
    tm = _pick_tile(M, 256, 8)
    tn = _pick_tile(N, 512, 128)
    return pl.pallas_call(
        functools.partial(_ln_linear_kernel, eps=eps, relu=relu),
        out_shape=jax.ShapeDtypeStruct((M, N), out_dtype),
        grid=(M // tm, N // tn),
        in_specs=[pl.BlockSpec((tm, K), lambda i, j: (i, 0)),
                  pl.BlockSpec((1, K), lambda i, j: (0, 0)),
                  pl.BlockSpec((1, K), lambda i, j: (0, 0)),
                  pl.BlockSpec((K, tn), lambda i, j: (0, j)),
                  pl.BlockSpec((1, tn), lambda i, j: (0, j))],
        out_specs=pl.BlockSpec((tm, tn), lambda i, j: (i, j)),
        scratch_shapes=[pltpu.VMEM((tm, K), jnp.bfloat16)],
        compiler_params=pltpu.CompilerParams(
            # j kept sequential per core so the j==0 LN scratch is valid for all N tiles
            dimension_semantics=("parallel", "arbitrary"),
            vmem_limit_bytes=_VMEM_LIMIT),
    )(x, g, b, w, bias)


def _linear_residual_kernel(x_ref, w_ref, bias_ref, res_ref, *rest, eps, final_ln):
    # out = res + x @ w + bias, K-tiled with a resident f32 accumulator.
    # Optionally applies the encoder's final LayerNorm in the epilogue (requires tn == N).
    if final_ln:
        g_ref, b_ref, o_ref, acc_ref = rest
    else:
        o_ref, acc_ref = rest
    k = pl.program_id(2)

    @pl.when(k == 0)
    def _():
        acc_ref[...] = jnp.zeros_like(acc_ref)

    acc_ref[...] += jnp.dot(x_ref[...], w_ref[...], preferred_element_type=jnp.float32)

    @pl.when(k == pl.num_programs(2) - 1)
    def _():
        y = acc_ref[...] + bias_ref[...] + res_ref[...].astype(jnp.float32)
        if final_ln:
            mean = jnp.mean(y, axis=-1, keepdims=True)
            var = jnp.mean((y - mean) ** 2, axis=-1, keepdims=True)
            y = (y - mean) * jax.lax.rsqrt(var + eps) * g_ref[...] + b_ref[...]
        o_ref[...] = y.astype(o_ref.dtype)


def linear_residual(x, w, bias, res, ln_g=None, ln_b=None, eps=1e-5):
    """res + x @ w + bias (optionally followed by a fused LayerNorm over the full row).

    x: (M, K) bf16, w: (K, N) bf16, bias: (1, N) f32, res: (M, N) f32 -> (M, N) f32."""
    M, K = x.shape
    N = w.shape[1]
    final_ln = ln_g is not None
    tm = _pick_tile(M, 256, 8)
    tn = N if final_ln else _pick_tile(N, 512, 128)    # LN needs the full feature row
    tk = _pick_tile(K, 512, 128)
    x = x.astype(jnp.bfloat16)

    in_specs = [pl.BlockSpec((tm, tk), lambda i, j, k: (i, k)),
                pl.BlockSpec((tk, tn), lambda i, j, k: (k, j)),
                pl.BlockSpec((1, tn), lambda i, j, k: (0, j)),
                pl.BlockSpec((tm, tn), lambda i, j, k: (i, j))]
    args = [x, w, bias, res]
    if final_ln:
        in_specs += [pl.BlockSpec((1, N), lambda i, j, k: (0, 0)),
                     pl.BlockSpec((1, N), lambda i, j, k: (0, 0))]
        args += [ln_g, ln_b]

    return pl.pallas_call(
        functools.partial(_linear_residual_kernel, eps=eps, final_ln=final_ln),
        out_shape=jax.ShapeDtypeStruct((M, N), res.dtype),
        grid=(M // tm, N // tn, K // tk),
        in_specs=in_specs,
        out_specs=pl.BlockSpec((tm, tn), lambda i, j, k: (i, j)),
        scratch_shapes=[pltpu.VMEM((tm, tn), jnp.float32)],
        input_output_aliases={3: 0},                   # residual stream updated in place
        compiler_params=pltpu.CompilerParams(
            dimension_semantics=("parallel", "parallel", "arbitrary"),
            vmem_limit_bytes=_VMEM_LIMIT),
    )(*args)


def _rel_attention_kernel(q_ref, k_ref, v_ref, rk_ref, rv_ref, m_ref, o_ref, *, scale):
    # One (batch, query-tile, head) grid step.  rel_k/rel_v arrive key-axis-last
    # (lane-dense); their contractions run on the VPU (broadcast FMA + sublane / lane
    # reductions), the content terms run on the MXU.
    q = q_ref[...]                                     # (tq, dk) bf16
    k = k_ref[...]                                     # (S,  dk) bf16
    v = v_ref[...]                                     # (S,  dk) bf16
    keep = m_ref[...] > 0.0                            # (1, S) key mask

    # content scores: Q K^T on the MXU
    s = jnp.einsum('qd,kd->qk', q, k, preferred_element_type=jnp.float32)    # (tq, S)
    # Shaw relative-K term: sum_d q[q,d] * rel_k[q,d,k]  (keys on lanes)
    q32 = q.astype(jnp.float32)
    s = s + jnp.sum(q32[:, :, None] * rk_ref[...].astype(jnp.float32), axis=1)
    s = s * scale
    s = jnp.where(keep, s, -1e9)

    p = jnp.exp(s - jnp.max(s, axis=-1, keepdims=True))
    attn = p * pl.reciprocal(jnp.sum(p, axis=-1, keepdims=True), approx=True)

    # content context: A V on the MXU
    ctx = jnp.dot(attn.astype(jnp.bfloat16), v, preferred_element_type=jnp.float32)  # (tq, dk)
    # Shaw relative-V term: sum_k attn[q,k] * rel_v[q,d,k]  (lane reduction over keys)
    ctx = ctx + jnp.sum(attn[:, None, :] * rv_ref[...].astype(jnp.float32), axis=-1)

    o_ref[...] = ctx.astype(o_ref.dtype)


def rel_attention(qkv, rel_k_t, rel_v_t, mask3):
    """qkv: (B, 3, H, S, dk) bf16, rel_k_t/rel_v_t: (B, S_q, dk, S_k) bf16,
    mask3: (B, 1, S) f32 -> (B, H, S, dk) bf16."""
    B, _, H, S, dk = qkv.shape
    scale = 1.0 / math.sqrt(dk)
    tq = _pick_q_tile(S, dk)
    # head innermost: the big rel blocks keep the same block index across heads and are
    # therefore DMA'd only once per (batch, query-tile); K/V per head are tiny by comparison.
    grid = (B, S // tq, H)

    q_spec = pl.BlockSpec((None, None, None, tq, dk), lambda b, qi, h: (b, 0, h, qi, 0))
    k_spec = pl.BlockSpec((None, None, None, S, dk), lambda b, qi, h: (b, 1, h, 0, 0))
    v_spec = pl.BlockSpec((None, None, None, S, dk), lambda b, qi, h: (b, 2, h, 0, 0))
    rel_spec = pl.BlockSpec((None, tq, dk, S), lambda b, qi, h: (b, qi, 0, 0))
    m_spec = pl.BlockSpec((None, 1, S), lambda b, qi, h: (b, 0, 0))

    return pl.pallas_call(
        functools.partial(_rel_attention_kernel, scale=scale),
        out_shape=jax.ShapeDtypeStruct((B, H, S, dk), jnp.bfloat16),
        grid=grid,
        in_specs=[q_spec, k_spec, v_spec, rel_spec, rel_spec, m_spec],
        out_specs=pl.BlockSpec((None, None, tq, dk), lambda b, qi, h: (b, h, qi, 0)),
        compiler_params=pltpu.CompilerParams(
            dimension_semantics=("parallel", "parallel", "arbitrary"),
            vmem_limit_bytes=_VMEM_LIMIT),
    )(qkv, qkv, qkv, rel_k_t, rel_v_t, mask3)


# ------------------------------ Model (glue) ---------------------------------

def relative_pos_emb(params, par_ids, bro_ids, sem_ids):
    """Embed the three relative-id tensors and sum -> (B, S, S, dk) for K and V."""
    rk = (jnp.take(params['rel_k_par'], par_ids, axis=0)
          + jnp.take(params['rel_k_bro'], bro_ids, axis=0)
          + jnp.take(params['rel_k_sem'], sem_ids, axis=0))
    rv = (jnp.take(params['rel_v_par'], par_ids, axis=0)
          + jnp.take(params['rel_v_bro'], bro_ids, axis=0)
          + jnp.take(params['rel_v_sem'], sem_ids, axis=0))
    return rk, rv


def encoder_layer(x2, B, S, mask3, rel_k_t, rel_v_t, lp, final_ln=None):
    D = x2.shape[1]
    H = NUM_HEADS
    dk = D // H

    # --- self-attention sublayer (pre-norm; residual fused into the WO kernel) ---
    qkv = ln_linear(x2, lp['ln1_g'], lp['ln1_b'], lp['wqkv'], lp['bqkv'],
                    out_dtype=jnp.bfloat16)                          # (B*S, 3D)
    # (B, S, 3, H, dk) -> (B, 3, H, S, dk): per-(q|k|v, head) slabs are selected by BlockSpec
    # index_maps with only leading squeezed dims (no in-kernel lane slicing).
    qkv = qkv.reshape(B, S, 3, H, dk).transpose(0, 2, 3, 1, 4)
    attn = rel_attention(qkv, rel_k_t, rel_v_t, mask3)               # (B, H, S, dk)
    attn = attn.transpose(0, 2, 1, 3).reshape(B * S, D)
    x2 = linear_residual(attn, lp['wo'], lp['bo'], x2)

    # --- feed-forward sublayer (pre-norm; residual + optional final LN fused into W2) ---
    h = ln_linear(x2, lp['ln2_g'], lp['ln2_b'], lp['w1'], lp['b1'],
                  relu=True, out_dtype=jnp.bfloat16)                 # (B*S, d_ff)
    if final_ln is None:
        x2 = linear_residual(h, lp['w2'], lp['b2'], x2)
    else:
        x2 = linear_residual(h, lp['w2'], lp['b2'], x2,
                             ln_g=final_ln[0], ln_b=final_ln[1])
    return x2


def encoder_forward(params, code, relative_par_ids, relative_bro_ids,
                    semantic_ids, code_mask):
    B, S, D = code.shape
    rel_k, rel_v = relative_pos_emb(params, relative_par_ids,
                                    relative_bro_ids, semantic_ids)
    # (B, S_q, S_k, dk) -> (B, S_q, dk, S_k): key axis last => lane-dense rel operands
    # (transposed once, shared by all layers); bf16 halves their HBM traffic.
    rel_k_t = jnp.transpose(rel_k.astype(jnp.bfloat16), (0, 1, 3, 2))
    rel_v_t = jnp.transpose(rel_v.astype(jnp.bfloat16), (0, 1, 3, 2))
    mask3 = code_mask.reshape(B, 1, S).astype(jnp.float32)

    x2 = code.reshape(B * S, D)                        # residual stream stays f32
    n = len(params['layers'])
    for li, lp in enumerate(params['layers']):
        fin = (params['ln_g'], params['ln_b']) if li == n - 1 else None
        x2 = encoder_layer(x2, B, S, mask3, rel_k_t, rel_v_t, lp, final_ln=fin)
    return x2.reshape(B, S, D)


# ------------------------------- Param init ----------------------------------

def init_params(key, n_layers, d_model, d_ff, num_heads, rel_vocab):
    dk = d_model // num_heads
    keys = iter(jax.random.split(key, 64))

    def nrm(shape, scale=0.02):
        return scale * jax.random.normal(next(keys), shape, jnp.float32)

    params = {
        'rel_k_par': nrm((rel_vocab, dk)), 'rel_k_bro': nrm((rel_vocab, dk)),
        'rel_k_sem': nrm((rel_vocab, dk)),
        'rel_v_par': nrm((rel_vocab, dk)), 'rel_v_bro': nrm((rel_vocab, dk)),
        'rel_v_sem': nrm((rel_vocab, dk)),
        'ln_g': jnp.ones((1, d_model), jnp.float32),
        'ln_b': jnp.zeros((1, d_model), jnp.float32),
        'layers': [],
    }
    for _ in range(n_layers):
        params['layers'].append({
            'wqkv': nrm((d_model, 3 * d_model)),          # fused Q|K|V projection
            'bqkv': jnp.zeros((1, 3 * d_model), jnp.float32),
            'wo': nrm((d_model, d_model)), 'bo': jnp.zeros((1, d_model), jnp.float32),
            'w1': nrm((d_model, d_ff)), 'b1': jnp.zeros((1, d_ff), jnp.float32),
            'w2': nrm((d_ff, d_model)), 'b2': jnp.zeros((1, d_model), jnp.float32),
            'ln1_g': jnp.ones((1, d_model), jnp.float32),
            'ln1_b': jnp.zeros((1, d_model), jnp.float32),
            'ln2_g': jnp.ones((1, d_model), jnp.float32),
            'ln2_b': jnp.zeros((1, d_model), jnp.float32),
        })
    return params


def prepare_params(params):
    """Pre-cast the matmul weights to bf16 once, OUTSIDE the kernels (halves the weight DMA
    and the double-buffered weight VMEM).  Biases / LayerNorm params stay f32."""
    p = dict(params)
    p['layers'] = []
    for lp in params['layers']:
        lp = dict(lp)
        for k in ('wqkv', 'wo', 'w1', 'w2'):
            lp[k] = lp[k].astype(jnp.bfloat16)
        p['layers'].append(lp)
    return p


# ----------------------------------- Main -------------------------------------

if __name__ == "__main__":
    B, S, D, D_FF, N_LAYERS, REL_VOCAB = 2, 8, 32, 64, 2, 16

    key = jax.random.PRNGKey(0)
    kp, kc, k1, k2, k3 = jax.random.split(key, 5)

    params = prepare_params(init_params(kp, N_LAYERS, D, D_FF, NUM_HEADS, REL_VOCAB))

    code = jax.random.normal(kc, (B, S, D), jnp.float32)
    relative_par_ids = jax.random.randint(k1, (B, S, S), 0, REL_VOCAB, jnp.int32)
    relative_bro_ids = jax.random.randint(k2, (B, S, S), 0, REL_VOCAB, jnp.int32)
    semantic_ids = jax.random.randint(k3, (B, S, S), 0, REL_VOCAB, jnp.int32)
    code_mask = jnp.ones((B, S), jnp.float32).at[1, 6:].set(0.0)  # pad last 2 of batch 1

    fwd = jax.jit(encoder_forward)
    out = fwd(params, code, relative_par_ids, relative_bro_ids,
              semantic_ids, code_mask)
    out = jax.block_until_ready(out)

    assert out.shape == (B, S, D) and out.dtype == jnp.float32
    assert bool(jnp.all(jnp.isfinite(out)))
    print("KERNEL_OK")
</pallas_src>

<mosaic_0001>
module attributes {stable_mosaic.version = 11 : i64} {
  func.func @_ln_linear_kernel(%arg0: i32, %arg1: i32, %arg2: memref<16x32xf32, #tpu.memory_space<vmem>>, %arg3: memref<1x32xf32, #tpu.memory_space<vmem>>, %arg4: memref<1x32xf32, #tpu.memory_space<vmem>>, %arg5: memref<32x96xbf16, #tpu.memory_space<vmem>>, %arg6: memref<1x96xf32, #tpu.memory_space<vmem>>, %arg7: memref<16x96xbf16, #tpu.memory_space<vmem>>, %arg8: memref<16x32xbf16, #tpu.memory_space<vmem>>) attributes {dimension_semantics = [#tpu.dimension_semantics<parallel>, #tpu.dimension_semantics<arbitrary>], iteration_bounds = array<i64: 1, 1>, scalar_prefetch = 0 : i64, scratch_operands = 1 : i64, tpu.core_type = #tpu.core_type<tc>, window_params = [{transform_indices = @transform_0, window_bounds = array<i64: 16, 32>}, {pipeline_mode = #tpu.pipeline_mode<synchronous>, transform_indices = @transform_1, window_bounds = array<i64: 1, 32>}, {pipeline_mode = #tpu.pipeline_mode<synchronous>, transform_indices = @transform_2, window_bounds = array<i64: 1, 32>}, {transform_indices = @transform_3, window_bounds = array<i64: 32, 96>}, {transform_indices = @transform_4, window_bounds = array<i64: 1, 96>}, {transform_indices = @transform_5, window_bounds = array<i64: 16, 96>}]} {
    %c0_i32 = arith.constant 0 : i32
    %0 = arith.cmpi eq, %arg1, %c0_i32 : i32
    %1 = arith.extui %0 : i1 to i32
    %c0_i32_0 = arith.constant 0 : i32
    %2 = arith.cmpi ne, %1, %c0_i32_0 : i32
    scf.if %2 {
      %c0_8 = arith.constant 0 : index
      %c0_9 = arith.constant 0 : index
      %11 = vector.load %arg2[%c0_8, %c0_9] : memref<16x32xf32, #tpu.memory_space<vmem>>, vector<16x32xf32>
      %cst_10 = arith.constant dense<0.000000e+00> : vector<16xf32>
      %12 = vector.multi_reduction <add>, %11, %cst_10 [1] : vector<16x32xf32> to vector<16xf32>
      %13 = vector.shape_cast %12 : vector<16xf32> to vector<16x1xf32>
      %cst_11 = arith.constant 3.200000e+01 : f32
      %14 = vector.broadcast %cst_11 : f32 to vector<16x1xf32>
      %15 = arith.divf %13, %14 : vector<16x1xf32>
      %16 = vector.broadcast %15 : vector<16x1xf32> to vector<16x32xf32>
      %17 = arith.subf %11, %16 : vector<16x32xf32>
      %18 = arith.mulf %17, %17 : vector<16x32xf32>
      %cst_12 = arith.constant dense<0.000000e+00> : vector<16xf32>
      %19 = vector.multi_reduction <add>, %18, %cst_12 [1] : vector<16x32xf32> to vector<16xf32>
      %20 = vector.shape_cast %19 : vector<16xf32> to vector<16x1xf32>
      %cst_13 = arith.constant 3.200000e+01 : f32
      %21 = vector.broadcast %cst_13 : f32 to vector<16x1xf32>
      %22 = arith.divf %20, %21 : vector<16x1xf32>
      %23 = vector.broadcast %15 : vector<16x1xf32> to vector<16x32xf32>
      %24 = arith.subf %11, %23 : vector<16x32xf32>
      %cst_14 = arith.constant 9.99999974E-6 : f32
      %25 = vector.broadcast %cst_14 : f32 to vector<16x1xf32>
      %26 = arith.addf %22, %25 : vector<16x1xf32>
      %27 = math.rsqrt %26 : vector<16x1xf32>
      %28 = vector.broadcast %27 : vector<16x1xf32> to vector<16x32xf32>
      %29 = arith.mulf %24, %28 : vector<16x32xf32>
      %c0_15 = arith.constant 0 : index
      %c0_16 = arith.constant 0 : index
      %30 = vector.load %arg3[%c0_15, %c0_16] : memref<1x32xf32, #tpu.memory_space<vmem>>, vector<1x32xf32>
      %31 = vector.broadcast %30 : vector<1x32xf32> to vector<16x32xf32>
      %32 = arith.mulf %29, %31 : vector<16x32xf32>
      %c0_17 = arith.constant 0 : index
      %c0_18 = arith.constant 0 : index
      %33 = vector.load %arg4[%c0_17, %c0_18] : memref<1x32xf32, #tpu.memory_space<vmem>>, vector<1x32xf32>
      %34 = vector.broadcast %33 : vector<1x32xf32> to vector<16x32xf32>
      %35 = arith.addf %32, %34 : vector<16x32xf32>
      %36 = arith.truncf %35 : vector<16x32xf32> to vector<16x32xbf16>
      %c0_19 = arith.constant 0 : index
      %c0_20 = arith.constant 0 : index
      %37 = vector.load %arg8[%c0_19, %c0_20] : memref<16x32xbf16, #tpu.memory_space<vmem>>, vector<16x32xbf16>
      tpu.vector_store %arg8[%c0_19, %c0_20], %36 {strides = array<i32>} : memref<16x32xbf16, #tpu.memory_space<vmem>>, vector<16x32xbf16>,
    } else {
    }
    %c0 = arith.constant 0 : index
    %c0_1 = arith.constant 0 : index
    %3 = vector.load %arg8[%c0, %c0_1] : memref<16x32xbf16, #tpu.memory_space<vmem>>, vector<16x32xbf16>
    %c0_2 = arith.constant 0 : index
    %c0_3 = arith.constant 0 : index
    %4 = vector.load %arg5[%c0_2, %c0_3] : memref<32x96xbf16, #tpu.memory_space<vmem>>, vector<32x96xbf16>
    %cst = arith.constant dense<0.000000e+00> : vector<16x96xf32>
    %5 = tpu.matmul %3, %4, %cst {dimension_numbers = #tpu.dot_dimension_numbers<[1], [0], [0], [1], [0, 0, 1, 1], [], []>} : vector<16x32xbf16>, vector<32x96xbf16>, vector<16x96xf32> -> vector<16x96xf32>
    %c0_4 = arith.constant 0 : index
    %c0_5 = arith.constant 0 : index
    %6 = vector.load %arg6[%c0_4, %c0_5] : memref<1x96xf32, #tpu.memory_space<vmem>>, vector<1x96xf32>
    %7 = vector.broadcast %6 : vector<1x96xf32> to vector<16x96xf32>
    %8 = arith.addf %5, %7 : vector<16x96xf32>
    %9 = arith.truncf %8 : vector<16x96xf32> to vector<16x96xbf16>
    %c0_6 = arith.constant 0 : index
    %c0_7 = arith.constant 0 : index
    %10 = vector.load %arg7[%c0_6, %c0_7] : memref<16x96xbf16, #tpu.memory_space<vmem>>, vector<16x96xbf16>
    tpu.vector_store %arg7[%c0_6, %c0_7], %9 {strides = array<i32>} : memref<16x96xbf16, #tpu.memory_space<vmem>>, vector<16x96xbf16>,
    return
  }
  func.func @transform_0(%arg0: i32, %arg1: i32) -> (i32, i32) {
    %c0_i32 = arith.constant 0 : i32
    %c0_i32_0 = arith.constant 0 : i32
    return %arg0, %c0_i32 : i32, i32
  }
  func.func @transform_1(%arg0: i32, %arg1: i32) -> (i32, i32) {
    %c0_i32 = arith.constant 0 : i32
    %c0_i32_0 = arith.constant 0 : i32
    %c0_i32_1 = arith.constant 0 : i32
    return %c0_i32, %c0_i32_0 : i32, i32
  }
  func.func @transform_2(%arg0: i32, %arg1: i32) -> (i32, i32) {
    %c0_i32 = arith.constant 0 : i32
    %c0_i32_0 = arith.constant 0 : i32
    %c0_i32_1 = arith.constant 0 : i32
    return %c0_i32, %c0_i32_0 : i32, i32
  }
  func.func @transform_3(%arg0: i32, %arg1: i32) -> (i32, i32) {
    %c0_i32 = arith.constant 0 : i32
    %c0_i32_0 = arith.constant 0 : i32
    return %c0_i32, %arg1 : i32, i32
  }
  func.func @transform_4(%arg0: i32, %arg1: i32) -> (i32, i32) {
    %c0_i32 = arith.constant 0 : i32
    %c0_i32_0 = arith.constant 0 : i32
    return %c0_i32, %arg1 : i32, i32
  }
  func.func @transform_5(%arg0: i32, %arg1: i32) -> (i32, i32) {
    %c0_i32 = arith.constant 0 : i32
    return %arg0, %arg1 : i32, i32
  }
}

module attributes {stable_mosaic.version = 11 : i64} {
  func.func @_rel_attention_kernel(%arg0: i32, %arg1: i32, %arg2: i32, %arg3: memref<1x1x1x8x8xbf16, #tpu.memory_space<vmem>>, %arg4: memref<1x1x1x8x8xbf16, #tpu.memory_space<vmem>>, %arg5: memref<1x1x1x8x8xbf16, #tpu.memory_space<vmem>>, %arg6: memref<1x8x8x8xbf16, #tpu.memory_space<vmem>>, %arg7: memref<1x8x8x8xbf16, #tpu.memory_space<vmem>>, %arg8: memref<1x1x8xf32, #tpu.memory_space<vmem>>, %arg9: memref<1x1x8x8xbf16, #tpu.memory_space<vmem>>) attributes {dimension_semantics = [#tpu.dimension_semantics<parallel>, #tpu.dimension_semantics<parallel>, #tpu.dimension_semantics<arbitrary>], iteration_bounds = array<i64: 2, 1, 4>, scalar_prefetch = 0 : i64, scratch_operands = 0 : i64, tpu.core_type = #tpu.core_type<tc>, window_params = [{transform_indices = @transform_0, window_bounds = array<i64: 1, 1, 1, 8, 8>}, {transform_indices = @transform_1, window_bounds = array<i64: 1, 1, 1, 8, 8>}, {transform_indices = @transform_2, window_bounds = array<i64: 1, 1, 1, 8, 8>}, {transform_indices = @transform_3, window_bounds = array<i64: 1, 8, 8, 8>}, {transform_indices = @transform_4, window_bounds = array<i64: 1, 8, 8, 8>}, {transform_indices = @transform_5, window_bounds = array<i64: 1, 1, 8>}, {transform_indices = @transform_6, window_bounds = array<i64: 1, 1, 8, 8>}]} {
    %c0 = arith.constant 0 : index
    %c0_0 = arith.constant 0 : index
    %c0_1 = arith.constant 0 : index
    %c0_2 = arith.constant 0 : index
    %c0_3 = arith.constant 0 : index
    %0 = vector.load %arg3[%c0, %c0_0, %c0_1, %c0_2, %c0_3] : memref<1x1x1x8x8xbf16, #tpu.memory_space<vmem>>, vector<1x1x1x8x8xbf16>
    %1 = vector.shape_cast %0 : vector<1x1x1x8x8xbf16> to vector<8x8xbf16>
    %c0_4 = arith.constant 0 : index
    %c0_5 = arith.constant 0 : index
    %c0_6 = arith.constant 0 : index
    %c0_7 = arith.constant 0 : index
    %c0_8 = arith.constant 0 : index
    %2 = vector.load %arg4[%c0_4, %c0_5, %c0_6, %c0_7, %c0_8] : memref<1x1x1x8x8xbf16, #tpu.memory_space<vmem>>, vector<1x1x1x8x8xbf16>
    %3 = vector.shape_cast %2 : vector<1x1x1x8x8xbf16> to vector<8x8xbf16>
    %c0_9 = arith.constant 0 : index
    %c0_10 = arith.constant 0 : index
    %c0_11 = arith.constant 0 : index
    %c0_12 = arith.constant 0 : index
    %c0_13 = arith.constant 0 : index
    %4 = vector.load %arg5[%c0_9, %c0_10, %c0_11, %c0_12, %c0_13] : memref<1x1x1x8x8xbf16, #tpu.memory_space<vmem>>, vector<1x1x1x8x8xbf16>
    %5 = vector.shape_cast %4 : vector<1x1x1x8x8xbf16> to vector<8x8xbf16>
    %c0_14 = arith.constant 0 : index
    %c0_15 = arith.constant 0 : index
    %c0_16 = arith.constant 0 : index
    %6 = vector.load %arg8[%c0_14, %c0_15, %c0_16] : memref<1x1x8xf32, #tpu.memory_space<vmem>>, vector<1x1x8xf32>
    %7 = vector.shape_cast %6 : vector<1x1x8xf32> to vector<1x8xf32>
    %cst = arith.constant 0.000000e+00 : f32
    %8 = vector.broadcast %cst : f32 to vector<1x8xf32>
    %9 = arith.cmpf ogt, %7, %8 : vector<1x8xf32>
    "tpu.trace_start"() <{level = 10 : i32, message = "qd,kd->qk"}> : () -> ()
    %cst_17 = arith.constant dense<0.000000e+00> : vector<8x8xf32>
    %10 = tpu.matmul %1, %3, %cst_17 {dimension_numbers = #tpu.dot_dimension_numbers<[1], [1], [0], [0], [0, 0, 1, 0], [], []>} : vector<8x8xbf16>, vector<8x8xbf16>, vector<8x8xf32> -> vector<8x8xf32>
    "tpu.trace_stop"() : () -> ()
    %11 = arith.extf %1 : vector<8x8xbf16> to vector<8x8xf32>
    %12 = vector.shape_cast %11 : vector<8x8xf32> to vector<8x8x1xf32>
    %c0_18 = arith.constant 0 : index
    %c0_19 = arith.constant 0 : index
    %c0_20 = arith.constant 0 : index
    %c0_21 = arith.constant 0 : index
    %13 = vector.load %arg6[%c0_18, %c0_19, %c0_20, %c0_21] : memref<1x8x8x8xbf16, #tpu.memory_space<vmem>>, vector<1x8x8x8xbf16>
    %14 = vector.shape_cast %13 : vector<1x8x8x8xbf16> to vector<8x8x8xbf16>
    %15 = arith.extf %14 : vector<8x8x8xbf16> to vector<8x8x8xf32>
    %16 = vector.broadcast %12 : vector<8x8x1xf32> to vector<8x8x8xf32>
    %17 = arith.mulf %16, %15 : vector<8x8x8xf32>
    %cst_22 = arith.constant dense<0.000000e+00> : vector<8x8xf32>
    %18 = vector.multi_reduction <add>, %17, %cst_22 [1] : vector<8x8x8xf32> to vector<8x8xf32>
    %19 = arith.addf %10, %18 : vector<8x8xf32>
    %cst_23 = arith.constant 0.353553385 : f32
    %20 = vector.broadcast %cst_23 : f32 to vector<8x8xf32>
    %21 = arith.mulf %19, %20 : vector<8x8xf32>
    %cst_24 = arith.constant -1.000000e+09 : f32
    %22 = vector.shape_cast %9 : vector<1x8xi1> to vector<1x8xi1>
    %23 = vector.broadcast %22 : vector<1x8xi1> to vector<8x8xi1>
    %24 = vector.broadcast %cst_24 : f32 to vector<8x8xf32>
    %25 = arith.select %23, %21, %24 : vector<8x8xi1>, vector<8x8xf32>
    %cst_25 = arith.constant dense<0xFF800000> : vector<8xf32>
    %26 = vector.multi_reduction <maximumf>, %25, %cst_25 [1] : vector<8x8xf32> to vector<8xf32>
    %27 = vector.shape_cast %26 : vector<8xf32> to vector<8x1xf32>
    %28 = vector.broadcast %27 : vector<8x1xf32> to vector<8x8xf32>
    %29 = arith.subf %25, %28 : vector<8x8xf32>
    %30 = math.exp %29 : vector<8x8xf32>
    %cst_26 = arith.constant dense<0.000000e+00> : vector<8xf32>
    %31 = vector.multi_reduction <add>, %30, %cst_26 [1] : vector<8x8xf32> to vector<8xf32>
    %32 = vector.shape_cast %31 : vector<8xf32> to vector<8x1xf32>
    %33 = tpu.reciprocal %32 {approx = true} : vector<8x1xf32> -> vector<8x1xf32>
    %34 = vector.broadcast %33 : vector<8x1xf32> to vector<8x8xf32>
    %35 = arith.mulf %30, %34 : vector<8x8xf32>
    %36 = arith.truncf %35 : vector<8x8xf32> to vector<8x8xbf16>
    %cst_27 = arith.constant dense<0.000000e+00> : vector<8x8xf32>
    %37 = tpu.matmul %36, %5, %cst_27 {dimension_numbers = #tpu.dot_dimension_numbers<[1], [0], [0], [1], [0, 0, 1, 1], [], []>} : vector<8x8xbf16>, vector<8x8xbf16>, vector<8x8xf32> -> vector<8x8xf32>
    %38 = vector.shape_cast %35 : vector<8x8xf32> to vector<8x1x8xf32>
    %c0_28 = arith.constant 0 : index
    %c0_29 = arith.constant 0 : index
    %c0_30 = arith.constant 0 : index
    %c0_31 = arith.constant 0 : index
    %39 = vector.load %arg7[%c0_28, %c0_29, %c0_30, %c0_31] : memref<1x8x8x8xbf16, #tpu.memory_space<vmem>>, vector<1x8x8x8xbf16>
    %40 = vector.shape_cast %39 : vector<1x8x8x8xbf16> to vector<8x8x8xbf16>
    %41 = arith.extf %40 : vector<8x8x8xbf16> to vector<8x8x8xf32>
    %42 = vector.broadcast %38 : vector<8x1x8xf32> to vector<8x8x8xf32>
    %43 = arith.mulf %42, %41 : vector<8x8x8xf32>
    %cst_32 = arith.constant dense<0.000000e+00> : vector<8x8xf32>
    %44 = vector.multi_reduction <add>, %43, %cst_32 [2] : vector<8x8x8xf32> to vector<8x8xf32>
    %45 = arith.addf %37, %44 : vector<8x8xf32>
    %46 = arith.truncf %45 : vector<8x8xf32> to vector<8x8xbf16>
    %c0_33 = arith.constant 0 : index
    %c0_34 = arith.constant 0 : index
    %c0_35 = arith.constant 0 : index
    %c0_36 = arith.constant 0 : index
    %47 = vector.load %arg9[%c0_33, %c0_34, %c0_35, %c0_36] : memref<1x1x8x8xbf16, #tpu.memory_space<vmem>>, vector<1x1x8x8xbf16>
    %48 = vector.shape_cast %47 : vector<1x1x8x8xbf16> to vector<8x8xbf16>
    %49 = vector.shape_cast %46 : vector<8x8xbf16> to vector<1x1x8x8xbf16>
    tpu.vector_store %arg9[%c0_33, %c0_34, %c0_35, %c0_36], %49 {strides = array<i32>} : memref<1x1x8x8xbf16, #tpu.memory_space<vmem>>, vector<1x1x8x8xbf16>,
    return
  }
  func.func @transform_0(%arg0: i32, %arg1: i32, %arg2: i32) -> (i32, i32, i32, i32, i32) {
    %c0_i32 = arith.constant 0 : i32
    %c0_i32_0 = arith.constant 0 : i32
    %c0_i32_1 = arith.constant 0 : i32
    return %arg0, %c0_i32, %arg2, %arg1, %c0_i32_0 : i32, i32, i32, i32, i32
  }
  func.func @transform_1(%arg0: i32, %arg1: i32, %arg2: i32) -> (i32, i32, i32, i32, i32) {
    %c1_i32 = arith.constant 1 : i32
    %c0_i32 = arith.constant 0 : i32
    %c0_i32_0 = arith.constant 0 : i32
    %c0_i32_1 = arith.constant 0 : i32
    return %arg0, %c1_i32, %arg2, %c0_i32, %c0_i32_0 : i32, i32, i32, i32, i32
  }
  func.func @transform_2(%arg0: i32, %arg1: i32, %arg2: i32) -> (i32, i32, i32, i32, i32) {
    %c2_i32 = arith.constant 2 : i32
    %c0_i32 = arith.constant 0 : i32
    %c0_i32_0 = arith.constant 0 : i32
    %c0_i32_1 = arith.constant 0 : i32
    return %arg0, %c2_i32, %arg2, %c0_i32, %c0_i32_0 : i32, i32, i32, i32, i32
  }
  func.func @transform_3(%arg0: i32, %arg1: i32, %arg2: i32) -> (i32, i32, i32, i32) {
    %c0_i32 = arith.constant 0 : i32
    %c0_i32_0 = arith.constant 0 : i32
    %c0_i32_1 = arith.constant 0 : i32
    return %arg0, %arg1, %c0_i32, %c0_i32_0 : i32, i32, i32, i32
  }
  func.func @transform_4(%arg0: i32, %arg1: i32, %arg2: i32) -> (i32, i32, i32, i32) {
    %c0_i32 = arith.constant 0 : i32
    %c0_i32_0 = arith.constant 0 : i32
    %c0_i32_1 = arith.constant 0 : i32
    return %arg0, %arg1, %c0_i32, %c0_i32_0 : i32, i32, i32, i32
  }
  func.func @transform_5(%arg0: i32, %arg1: i32, %arg2: i32) -> (i32, i32, i32) {
    %c0_i32 = arith.constant 0 : i32
    %c0_i32_0 = arith.constant 0 : i32
    %c0_i32_1 = arith.constant 0 : i32
    return %arg0, %c0_i32, %c0_i32_0 : i32, i32, i32
  }
  func.func @transform_6(%arg0: i32, %arg1: i32, %arg2: i32) -> (i32, i32, i32, i32) {
    %c0_i32 = arith.constant 0 : i32
    %c0_i32_0 = arith.constant 0 : i32
    return %arg0, %arg2, %arg1, %c0_i32 : i32, i32, i32, i32
  }
}

module attributes {stable_mosaic.version = 11 : i64} {
  func.func @_ln_linear_kernel(%arg0: i32, %arg1: i32, %arg2: memref<16x32xf32, #tpu.memory_space<vmem>>, %arg3: memref<1x32xf32, #tpu.memory_space<vmem>>, %arg4: memref<1x32xf32, #tpu.memory_space<vmem>>, %arg5: memref<32x64xbf16, #tpu.memory_space<vmem>>, %arg6: memref<1x64xf32, #tpu.memory_space<vmem>>, %arg7: memref<16x64xbf16, #tpu.memory_space<vmem>>, %arg8: memref<16x32xbf16, #tpu.memory_space<vmem>>) attributes {dimension_semantics = [#tpu.dimension_semantics<parallel>, #tpu.dimension_semantics<arbitrary>], iteration_bounds = array<i64: 1, 1>, scalar_prefetch = 0 : i64, scratch_operands = 1 : i64, tpu.core_type = #tpu.core_type<tc>, window_params = [{transform_indices = @transform_0, window_bounds = array<i64: 16, 32>}, {pipeline_mode = #tpu.pipeline_mode<synchronous>, transform_indices = @transform_1, window_bounds = array<i64: 1, 32>}, {pipeline_mode = #tpu.pipeline_mode<synchronous>, transform_indices = @transform_2, window_bounds = array<i64: 1, 32>}, {transform_indices = @transform_3, window_bounds = array<i64: 32, 64>}, {transform_indices = @transform_4, window_bounds = array<i64: 1, 64>}, {transform_indices = @transform_5, window_bounds = array<i64: 16, 64>}]} {
    %c0_i32 = arith.constant 0 : i32
    %0 = arith.cmpi eq, %arg1, %c0_i32 : i32
    %1 = arith.extui %0 : i1 to i32
    %c0_i32_0 = arith.constant 0 : i32
    %2 = arith.cmpi ne, %1, %c0_i32_0 : i32
    scf.if %2 {
      %c0_9 = arith.constant 0 : index
      %c0_10 = arith.constant 0 : index
      %13 = vector.load %arg2[%c0_9, %c0_10] : memref<16x32xf32, #tpu.memory_space<vmem>>, vector<16x32xf32>
      %cst_11 = arith.constant dense<0.000000e+00> : vector<16xf32>
      %14 = vector.multi_reduction <add>, %13, %cst_11 [1] : vector<16x32xf32> to vector<16xf32>
      %15 = vector.shape_cast %14 : vector<16xf32> to vector<16x1xf32>
      %cst_12 = arith.constant 3.200000e+01 : f32
      %16 = vector.broadcast %cst_12 : f32 to vector<16x1xf32>
      %17 = arith.divf %15, %16 : vector<16x1xf32>
      %18 = vector.broadcast %17 : vector<16x1xf32> to vector<16x32xf32>
      %19 = arith.subf %13, %18 : vector<16x32xf32>
      %20 = arith.mulf %19, %19 : vector<16x32xf32>
      %cst_13 = arith.constant dense<0.000000e+00> : vector<16xf32>
      %21 = vector.multi_reduction <add>, %20, %cst_13 [1] : vector<16x32xf32> to vector<16xf32>
      %22 = vector.shape_cast %21 : vector<16xf32> to vector<16x1xf32>
      %cst_14 = arith.constant 3.200000e+01 : f32
      %23 = vector.broadcast %cst_14 : f32 to vector<16x1xf32>
      %24 = arith.divf %22, %23 : vector<16x1xf32>
      %25 = vector.broadcast %17 : vector<16x1xf32> to vector<16x32xf32>
      %26 = arith.subf %13, %25 : vector<16x32xf32>
      %cst_15 = arith.constant 9.99999974E-6 : f32
      %27 = vector.broadcast %cst_15 : f32 to vector<16x1xf32>
      %28 = arith.addf %24, %27 : vector<16x1xf32>
      %29 = math.rsqrt %28 : vector<16x1xf32>
      %30 = vector.broadcast %29 : vector<16x1xf32> to vector<16x32xf32>
      %31 = arith.mulf %26, %30 : vector<16x32xf32>
      %c0_16 = arith.constant 0 : index
      %c0_17 = arith.constant 0 : index
      %32 = vector.load %arg3[%c0_16, %c0_17] : memref<1x32xf32, #tpu.memory_space<vmem>>, vector<1x32xf32>
      %33 = vector.broadcast %32 : vector<1x32xf32> to vector<16x32xf32>
      %34 = arith.mulf %31, %33 : vector<16x32xf32>
      %c0_18 = arith.constant 0 : index
      %c0_19 = arith.constant 0 : index
      %35 = vector.load %arg4[%c0_18, %c0_19] : memref<1x32xf32, #tpu.memory_space<vmem>>, vector<1x32xf32>
      %36 = vector.broadcast %35 : vector<1x32xf32> to vector<16x32xf32>
      %37 = arith.addf %34, %36 : vector<16x32xf32>
      %38 = arith.truncf %37 : vector<16x32xf32> to vector<16x32xbf16>
      %c0_20 = arith.constant 0 : index
      %c0_21 = arith.constant 0 : index
      %39 = vector.load %arg8[%c0_20, %c0_21] : memref<16x32xbf16, #tpu.memory_space<vmem>>, vector<16x32xbf16>
      tpu.vector_store %arg8[%c0_20, %c0_21], %38 {strides = array<i32>} : memref<16x32xbf16, #tpu.memory_space<vmem>>, vector<16x32xbf16>,
    } else {
    }
    %c0 = arith.constant 0 : index
    %c0_1 = arith.constant 0 : index
    %3 = vector.load %arg8[%c0, %c0_1] : memref<16x32xbf16, #tpu.memory_space<vmem>>, vector<16x32xbf16>
    %c0_2 = arith.constant 0 : index
    %c0_3 = arith.constant 0 : index
    %4 = vector.load %arg5[%c0_2, %c0_3] : memref<32x64xbf16, #tpu.memory_space<vmem>>, vector<32x64xbf16>
    %cst = arith.constant dense<0.000000e+00> : vector<16x64xf32>
    %5 = tpu.matmul %3, %4, %cst {dimension_numbers = #tpu.dot_dimension_numbers<[1], [0], [0], [1], [0, 0, 1, 1], [], []>} : vector<16x32xbf16>, vector<32x64xbf16>, vector<16x64xf32> -> vector<16x64xf32>
    %c0_4 = arith.constant 0 : index
    %c0_5 = arith.constant 0 : index
    %6 = vector.load %arg6[%c0_4, %c0_5] : memref<1x64xf32, #tpu.memory_space<vmem>>, vector<1x64xf32>
    %7 = vector.broadcast %6 : vector<1x64xf32> to vector<16x64xf32>
    %8 = arith.addf %5, %7 : vector<16x64xf32>
    %cst_6 = arith.constant 0.000000e+00 : f32
    %9 = vector.broadcast %cst_6 : f32 to vector<16x64xf32>
    %10 = arith.maximumf %8, %9 : vector<16x64xf32>
    %11 = arith.truncf %10 : vector<16x64xf32> to vector<16x64xbf16>
    %c0_7 = arith.constant 0 : index
    %c0_8 = arith.constant 0 : index
    %12 = vector.load %arg7[%c0_7, %c0_8] : memref<16x64xbf16, #tpu.memory_space<vmem>>, vector<16x64xbf16>
    tpu.vector_store %arg7[%c0_7, %c0_8], %11 {strides = array<i32>} : memref<16x64xbf16, #tpu.memory_space<vmem>>, vector<16x64xbf16>,
    return
  }
  func.func @transform_0(%arg0: i32, %arg1: i32) -> (i32, i32) {
    %c0_i32 = arith.constant 0 : i32
    %c0_i32_0 = arith.constant 0 : i32
    return %arg0, %c0_i32 : i32, i32
  }
  func.func @transform_1(%arg0: i32, %arg1: i32) -> (i32, i32) {
    %c0_i32 = arith.constant 0 : i32
    %c0_i32_0 = arith.constant 0 : i32
    %c0_i32_1 = arith.constant 0 : i32
    return %c0_i32, %c0_i32_0 : i32, i32
  }
  func.func @transform_2(%arg0: i32, %arg1: i32) -> (i32, i32) {
    %c0_i32 = arith.constant 0 : i32
    %c0_i32_0 = arith.constant 0 : i32
    %c0_i32_1 = arith.constant 0 : i32
    return %c0_i32, %c0_i32_0 : i32, i32
  }
  func.func @transform_3(%arg0: i32, %arg1: i32) -> (i32, i32) {
    %c0_i32 = arith.constant 0 : i32
    %c0_i32_0 = arith.constant 0 : i32
    return %c0_i32, %arg1 : i32, i32
  }
  func.func @transform_4(%arg0: i32, %arg1: i32) -> (i32, i32) {
    %c0_i32 = arith.constant 0 : i32
    %c0_i32_0 = arith.constant 0 : i32
    return %c0_i32, %arg1 : i32, i32
  }
  func.func @transform_5(%arg0: i32, %arg1: i32) -> (i32, i32) {
    %c0_i32 = arith.constant 0 : i32
    return %arg0, %arg1 : i32, i32
  }
}

module attributes {stable_mosaic.version = 11 : i64} {
  func.func @_linear_residual_kernel(%arg0: i32, %arg1: i32, %arg2: i32, %arg3: memref<16x64xbf16, #tpu.memory_space<vmem>>, %arg4: memref<64x32xbf16, #tpu.memory_space<vmem>>, %arg5: memref<1x32xf32, #tpu.memory_space<vmem>>, %arg6: memref<16x32xf32, #tpu.memory_space<vmem>>, %arg7: memref<16x32xf32, #tpu.memory_space<vmem>>, %arg8: memref<16x32xf32, #tpu.memory_space<vmem>>) attributes {dimension_semantics = [#tpu.dimension_semantics<parallel>, #tpu.dimension_semantics<parallel>, #tpu.dimension_semantics<arbitrary>], iteration_bounds = array<i64: 1, 1, 1>, scalar_prefetch = 0 : i64, scratch_operands = 1 : i64, tpu.core_type = #tpu.core_type<tc>, window_params = [{transform_indices = @transform_0, window_bounds = array<i64: 16, 64>}, {transform_indices = @transform_1, window_bounds = array<i64: 64, 32>}, {transform_indices = @transform_2, window_bounds = array<i64: 1, 32>}, {transform_indices = @transform_3, window_bounds = array<i64: 16, 32>}, {transform_indices = @transform_4, window_bounds = array<i64: 16, 32>}]} {
    %c0_i32 = arith.constant 0 : i32
    %0 = arith.cmpi eq, %arg2, %c0_i32 : i32
    %1 = arith.extui %0 : i1 to i32
    %c0_i32_0 = arith.constant 0 : i32
    %2 = arith.cmpi ne, %1, %c0_i32_0 : i32
    scf.if %2 {
      %cst_10 = arith.constant 0.000000e+00 : f32
      %12 = vector.broadcast %cst_10 : f32 to vector<16x32xf32>
      %c0_11 = arith.constant 0 : index
      %c0_12 = arith.constant 0 : index
      %13 = vector.load %arg8[%c0_11, %c0_12] : memref<16x32xf32, #tpu.memory_space<vmem>>, vector<16x32xf32>
      tpu.vector_store %arg8[%c0_11, %c0_12], %12 {strides = array<i32>} : memref<16x32xf32, #tpu.memory_space<vmem>>, vector<16x32xf32>,
    } else {
    }
    %c0 = arith.constant 0 : index
    %c0_1 = arith.constant 0 : index
    %3 = vector.load %arg8[%c0, %c0_1] : memref<16x32xf32, #tpu.memory_space<vmem>>, vector<16x32xf32>
    %c0_2 = arith.constant 0 : index
    %c0_3 = arith.constant 0 : index
    %4 = vector.load %arg3[%c0_2, %c0_3] : memref<16x64xbf16, #tpu.memory_space<vmem>>, vector<16x64xbf16>
    %c0_4 = arith.constant 0 : index
    %c0_5 = arith.constant 0 : index
    %5 = vector.load %arg4[%c0_4, %c0_5] : memref<64x32xbf16, #tpu.memory_space<vmem>>, vector<64x32xbf16>
    %cst = arith.constant dense<0.000000e+00> : vector<16x32xf32>
    %6 = tpu.matmul %4, %5, %cst {dimension_numbers = #tpu.dot_dimension_numbers<[1], [0], [0], [1], [0, 0, 1, 1], [], []>} : vector<16x64xbf16>, vector<64x32xbf16>, vector<16x32xf32> -> vector<16x32xf32>
    %7 = arith.addf %3, %6 : vector<16x32xf32>
    %c0_6 = arith.constant 0 : index
    %c0_7 = arith.constant 0 : index
    %8 = vector.load %arg8[%c0_6, %c0_7] : memref<16x32xf32, #tpu.memory_space<vmem>>, vector<16x32xf32>
    tpu.vector_store %arg8[%c0_6, %c0_7], %7 {strides = array<i32>} : memref<16x32xf32, #tpu.memory_space<vmem>>, vector<16x32xf32>,
    %c0_i32_8 = arith.constant 0 : i32
    %9 = arith.cmpi eq, %arg2, %c0_i32_8 : i32
    %10 = arith.extui %9 : i1 to i32
    %c0_i32_9 = arith.constant 0 : i32
    %11 = arith.cmpi ne, %10, %c0_i32_9 : i32
    scf.if %11 {
      %c0_10 = arith.constant 0 : index
      %c0_11 = arith.constant 0 : index
      %12 = vector.load %arg8[%c0_10, %c0_11] : memref<16x32xf32, #tpu.memory_space<vmem>>, vector<16x32xf32>
      %c0_12 = arith.constant 0 : index
      %c0_13 = arith.constant 0 : index
      %13 = vector.load %arg5[%c0_12, %c0_13] : memref<1x32xf32, #tpu.memory_space<vmem>>, vector<1x32xf32>
      %14 = vector.broadcast %13 : vector<1x32xf32> to vector<16x32xf32>
      %15 = arith.addf %12, %14 : vector<16x32xf32>
      %c0_14 = arith.constant 0 : index
      %c0_15 = arith.constant 0 : index
      %16 = vector.load %arg6[%c0_14, %c0_15] : memref<16x32xf32, #tpu.memory_space<vmem>>, vector<16x32xf32>
      %17 = arith.addf %15, %16 : vector<16x32xf32>
      %c0_16 = arith.constant 0 : index
      %c0_17 = arith.constant 0 : index
      %18 = vector.load %arg7[%c0_16, %c0_17] : memref<16x32xf32, #tpu.memory_space<vmem>>, vector<16x32xf32>
      tpu.vector_store %arg7[%c0_16, %c0_17], %17 {strides = array<i32>} : memref<16x32xf32, #tpu.memory_space<vmem>>, vector<16x32xf32>,
    } else {
    }
    return
  }
  func.func @transform_0(%arg0: i32, %arg1: i32, %arg2: i32) -> (i32, i32) {
    %c0_i32 = arith.constant 0 : i32
    return %arg0, %arg2 : i32, i32
  }
  func.func @transform_1(%arg0: i32, %arg1: i32, %arg2: i32) -> (i32, i32) {
    %c0_i32 = arith.constant 0 : i32
    return %arg2, %arg1 : i32, i32
  }
  func.func @transform_2(%arg0: i32, %arg1: i32, %arg2: i32) -> (i32, i32) {
    %c0_i32 = arith.constant 0 : i32
    %c0_i32_0 = arith.constant 0 : i32
    return %c0_i32, %arg1 : i32, i32
  }
  func.func @transform_3(%arg0: i32, %arg1: i32, %arg2: i32) -> (i32, i32) {
    %c0_i32 = arith.constant 0 : i32
    return %arg0, %arg1 : i32, i32
  }
  func.func @transform_4(%arg0: i32, %arg1: i32, %arg2: i32) -> (i32, i32) {
    %c0_i32 = arith.constant 0 : i32
    return %arg0, %arg1 : i32, i32
  }
}

module attributes {stable_mosaic.version = 11 : i64} {
  func.func @_linear_residual_kernel(%arg0: i32, %arg1: i32, %arg2: i32, %arg3: memref<16x32xbf16, #tpu.memory_space<vmem>>, %arg4: memref<32x32xbf16, #tpu.memory_space<vmem>>, %arg5: memref<1x32xf32, #tpu.memory_space<vmem>>, %arg6: memref<16x32xf32, #tpu.memory_space<vmem>>, %arg7: memref<16x32xf32, #tpu.memory_space<vmem>>, %arg8: memref<16x32xf32, #tpu.memory_space<vmem>>) attributes {dimension_semantics = [#tpu.dimension_semantics<parallel>, #tpu.dimension_semantics<parallel>, #tpu.dimension_semantics<arbitrary>], iteration_bounds = array<i64: 1, 1, 1>, scalar_prefetch = 0 : i64, scratch_operands = 1 : i64, tpu.core_type = #tpu.core_type<tc>, window_params = [{transform_indices = @transform_0, window_bounds = array<i64: 16, 32>}, {transform_indices = @transform_1, window_bounds = array<i64: 32, 32>}, {transform_indices = @transform_2, window_bounds = array<i64: 1, 32>}, {transform_indices = @transform_3, window_bounds = array<i64: 16, 32>}, {transform_indices = @transform_4, window_bounds = array<i64: 16, 32>}]} {
    %c0_i32 = arith.constant 0 : i32
    %0 = arith.cmpi eq, %arg2, %c0_i32 : i32
    %1 = arith.extui %0 : i1 to i32
    %c0_i32_0 = arith.constant 0 : i32
    %2 = arith.cmpi ne, %1, %c0_i32_0 : i32
    scf.if %2 {
      %cst_10 = arith.constant 0.000000e+00 : f32
      %12 = vector.broadcast %cst_10 : f32 to vector<16x32xf32>
      %c0_11 = arith.constant 0 : index
      %c0_12 = arith.constant 0 : index
      %13 = vector.load %arg8[%c0_11, %c0_12] : memref<16x32xf32, #tpu.memory_space<vmem>>, vector<16x32xf32>
      tpu.vector_store %arg8[%c0_11, %c0_12], %12 {strides = array<i32>} : memref<16x32xf32, #tpu.memory_space<vmem>>, vector<16x32xf32>,
    } else {
    }
    %c0 = arith.constant 0 : index
    %c0_1 = arith.constant 0 : index
    %3 = vector.load %arg8[%c0, %c0_1] : memref<16x32xf32, #tpu.memory_space<vmem>>, vector<16x32xf32>
    %c0_2 = arith.constant 0 : index
    %c0_3 = arith.constant 0 : index
    %4 = vector.load %arg3[%c0_2, %c0_3] : memref<16x32xbf16, #tpu.memory_space<vmem>>, vector<16x32xbf16>
    %c0_4 = arith.constant 0 : index
    %c0_5 = arith.constant 0 : index
    %5 = vector.load %arg4[%c0_4, %c0_5] : memref<32x32xbf16, #tpu.memory_space<vmem>>, vector<32x32xbf16>
    %cst = arith.constant dense<0.000000e+00> : vector<16x32xf32>
    %6 = tpu.matmul %4, %5, %cst {dimension_numbers = #tpu.dot_dimension_numbers<[1], [0], [0], [1], [0, 0, 1, 1], [], []>} : vector<16x32xbf16>, vector<32x32xbf16>, vector<16x32xf32> -> vector<16x32xf32>
    %7 = arith.addf %3, %6 : vector<16x32xf32>
    %c0_6 = arith.constant 0 : index
    %c0_7 = arith.constant 0 : index
    %8 = vector.load %arg8[%c0_6, %c0_7] : memref<16x32xf32, #tpu.memory_space<vmem>>, vector<16x32xf32>
    tpu.vector_store %arg8[%c0_6, %c0_7], %7 {strides = array<i32>} : memref<16x32xf32, #tpu.memory_space<vmem>>, vector<16x32xf32>,
    %c0_i32_8 = arith.constant 0 : i32
    %9 = arith.cmpi eq, %arg2, %c0_i32_8 : i32
    %10 = arith.extui %9 : i1 to i32
    %c0_i32_9 = arith.constant 0 : i32
    %11 = arith.cmpi ne, %10, %c0_i32_9 : i32
    scf.if %11 {
      %c0_10 = arith.constant 0 : index
      %c0_11 = arith.constant 0 : index
      %12 = vector.load %arg8[%c0_10, %c0_11] : memref<16x32xf32, #tpu.memory_space<vmem>>, vector<16x32xf32>
      %c0_12 = arith.constant 0 : index
      %c0_13 = arith.constant 0 : index
      %13 = vector.load %arg5[%c0_12, %c0_13] : memref<1x32xf32, #tpu.memory_space<vmem>>, vector<1x32xf32>
      %14 = vector.broadcast %13 : vector<1x32xf32> to vector<16x32xf32>
      %15 = arith.addf %12, %14 : vector<16x32xf32>
      %c0_14 = arith.constant 0 : index
      %c0_15 = arith.constant 0 : index
      %16 = vector.load %arg6[%c0_14, %c0_15] : memref<16x32xf32, #tpu.memory_space<vmem>>, vector<16x32xf32>
      %17 = arith.addf %15, %16 : vector<16x32xf32>
      %c0_16 = arith.constant 0 : index
      %c0_17 = arith.constant 0 : index
      %18 = vector.load %arg7[%c0_16, %c0_17] : memref<16x32xf32, #tpu.memory_space<vmem>>, vector<16x32xf32>
      tpu.vector_store %arg7[%c0_16, %c0_17], %17 {strides = array<i32>} : memref<16x32xf32, #tpu.memory_space<vmem>>, vector<16x32xf32>,
    } else {
    }
    return
  }
  func.func @transform_0(%arg0: i32, %arg1: i32, %arg2: i32) -> (i32, i32) {
    %c0_i32 = arith.constant 0 : i32
    return %arg0, %arg2 : i32, i32
  }
  func.func @transform_1(%arg0: i32, %arg1: i32, %arg2: i32) -> (i32, i32) {
    %c0_i32 = arith.constant 0 : i32
    return %arg2, %arg1 : i32, i32
  }
  func.func @transform_2(%arg0: i32, %arg1: i32, %arg2: i32) -> (i32, i32) {
    %c0_i32 = arith.constant 0 : i32
    %c0_i32_0 = arith.constant 0 : i32
    return %c0_i32, %arg1 : i32, i32
  }
  func.func @transform_3(%arg0: i32, %arg1: i32, %arg2: i32) -> (i32, i32) {
    %c0_i32 = arith.constant 0 : i32
    return %arg0, %arg1 : i32, i32
  }
  func.func @transform_4(%arg0: i32, %arg1: i32, %arg2: i32) -> (i32, i32) {
    %c0_i32 = arith.constant 0 : i32
    return %arg0, %arg1 : i32, i32
  }
}

module attributes {stable_mosaic.version = 11 : i64} {
  func.func @_linear_residual_kernel(%arg0: i32, %arg1: i32, %arg2: i32, %arg3: memref<16x64xbf16, #tpu.memory_space<vmem>>, %arg4: memref<64x32xbf16, #tpu.memory_space<vmem>>, %arg5: memref<1x32xf32, #tpu.memory_space<vmem>>, %arg6: memref<16x32xf32, #tpu.memory_space<vmem>>, %arg7: memref<1x32xf32, #tpu.memory_space<vmem>>, %arg8: memref<1x32xf32, #tpu.memory_space<vmem>>, %arg9: memref<16x32xf32, #tpu.memory_space<vmem>>, %arg10: memref<16x32xf32, #tpu.memory_space<vmem>>) attributes {dimension_semantics = [#tpu.dimension_semantics<parallel>, #tpu.dimension_semantics<parallel>, #tpu.dimension_semantics<arbitrary>], iteration_bounds = array<i64: 1, 1, 1>, scalar_prefetch = 0 : i64, scratch_operands = 1 : i64, tpu.core_type = #tpu.core_type<tc>, window_params = [{transform_indices = @transform_0, window_bounds = array<i64: 16, 64>}, {transform_indices = @transform_1, window_bounds = array<i64: 64, 32>}, {transform_indices = @transform_2, window_bounds = array<i64: 1, 32>}, {transform_indices = @transform_3, window_bounds = array<i64: 16, 32>}, {pipeline_mode = #tpu.pipeline_mode<synchronous>, transform_indices = @transform_4, window_bounds = array<i64: 1, 32>}, {pipeline_mode = #tpu.pipeline_mode<synchronous>, transform_indices = @transform_5, window_bounds = array<i64: 1, 32>}, {transform_indices = @transform_6, window_bounds = array<i64: 16, 32>}]} {
    %c0_i32 = arith.constant 0 : i32
    %0 = arith.cmpi eq, %arg2, %c0_i32 : i32
    %1 = arith.extui %0 : i1 to i32
    %c0_i32_0 = arith.constant 0 : i32
    %2 = arith.cmpi ne, %1, %c0_i32_0 : i32
    scf.if %2 {
      %cst_10 = arith.constant 0.000000e+00 : f32
      %12 = vector.broadcast %cst_10 : f32 to vector<16x32xf32>
      %c0_11 = arith.constant 0 : index
      %c0_12 = arith.constant 0 : index
      %13 = vector.load %arg10[%c0_11, %c0_12] : memref<16x32xf32, #tpu.memory_space<vmem>>, vector<16x32xf32>
      tpu.vector_store %arg10[%c0_11, %c0_12], %12 {strides = array<i32>} : memref<16x32xf32, #tpu.memory_space<vmem>>, vector<16x32xf32>,
    } else {
    }
    %c0 = arith.constant 0 : index
    %c0_1 = arith.constant 0 : index
    %3 = vector.load %arg10[%c0, %c0_1] : memref<16x32xf32, #tpu.memory_space<vmem>>, vector<16x32xf32>
    %c0_2 = arith.constant 0 : index
    %c0_3 = arith.constant 0 : index
    %4 = vector.load %arg3[%c0_2, %c0_3] : memref<16x64xbf16, #tpu.memory_space<vmem>>, vector<16x64xbf16>
    %c0_4 = arith.constant 0 : index
    %c0_5 = arith.constant 0 : index
    %5 = vector.load %arg4[%c0_4, %c0_5] : memref<64x32xbf16, #tpu.memory_space<vmem>>, vector<64x32xbf16>
    %cst = arith.constant dense<0.000000e+00> : vector<16x32xf32>
    %6 = tpu.matmul %4, %5, %cst {dimension_numbers = #tpu.dot_dimension_numbers<[1], [0], [0], [1], [0, 0, 1, 1], [], []>} : vector<16x64xbf16>, vector<64x32xbf16>, vector<16x32xf32> -> vector<16x32xf32>
    %7 = arith.addf %3, %6 : vector<16x32xf32>
    %c0_6 = arith.constant 0 : index
    %c0_7 = arith.constant 0 : index
    %8 = vector.load %arg10[%c0_6, %c0_7] : memref<16x32xf32, #tpu.memory_space<vmem>>, vector<16x32xf32>
    tpu.vector_store %arg10[%c0_6, %c0_7], %7 {strides = array<i32>} : memref<16x32xf32, #tpu.memory_space<vmem>>, vector<16x32xf32>,
    %c0_i32_8 = arith.constant 0 : i32
    %9 = arith.cmpi eq, %arg2, %c0_i32_8 : i32
    %10 = arith.extui %9 : i1 to i32
    %c0_i32_9 = arith.constant 0 : i32
    %11 = arith.cmpi ne, %10, %c0_i32_9 : i32
    scf.if %11 {
      %c0_10 = arith.constant 0 : index
      %c0_11 = arith.constant 0 : index
      %12 = vector.load %arg10[%c0_10, %c0_11] : memref<16x32xf32, #tpu.memory_space<vmem>>, vector<16x32xf32>
      %c0_12 = arith.constant 0 : index
      %c0_13 = arith.constant 0 : index
      %13 = vector.load %arg5[%c0_12, %c0_13] : memref<1x32xf32, #tpu.memory_space<vmem>>, vector<1x32xf32>
      %14 = vector.broadcast %13 : vector<1x32xf32> to vector<16x32xf32>
      %15 = arith.addf %12, %14 : vector<16x32xf32>
      %c0_14 = arith.constant 0 : index
      %c0_15 = arith.constant 0 : index
      %16 = vector.load %arg6[%c0_14, %c0_15] : memref<16x32xf32, #tpu.memory_space<vmem>>, vector<16x32xf32>
      %17 = arith.addf %15, %16 : vector<16x32xf32>
      %cst_16 = arith.constant dense<0.000000e+00> : vector<16xf32>
      %18 = vector.multi_reduction <add>, %17, %cst_16 [1] : vector<16x32xf32> to vector<16xf32>
      %19 = vector.shape_cast %18 : vector<16xf32> to vector<16x1xf32>
      %cst_17 = arith.constant 3.200000e+01 : f32
      %20 = vector.broadcast %cst_17 : f32 to vector<16x1xf32>
      %21 = arith.divf %19, %20 : vector<16x1xf32>
      %22 = vector.broadcast %21 : vector<16x1xf32> to vector<16x32xf32>
      %23 = arith.subf %17, %22 : vector<16x32xf32>
      %24 = arith.mulf %23, %23 : vector<16x32xf32>
      %cst_18 = arith.constant dense<0.000000e+00> : vector<16xf32>
      %25 = vector.multi_reduction <add>, %24, %cst_18 [1] : vector<16x32xf32> to vector<16xf32>
      %26 = vector.shape_cast %25 : vector<16xf32> to vector<16x1xf32>
      %cst_19 = arith.constant 3.200000e+01 : f32
      %27 = vector.broadcast %cst_19 : f32 to vector<16x1xf32>
      %28 = arith.divf %26, %27 : vector<16x1xf32>
      %29 = vector.broadcast %21 : vector<16x1xf32> to vector<16x32xf32>
      %30 = arith.subf %17, %29 : vector<16x32xf32>
      %cst_20 = arith.constant 9.99999974E-6 : f32
      %31 = vector.broadcast %cst_20 : f32 to vector<16x1xf32>
      %32 = arith.addf %28, %31 : vector<16x1xf32>
      %33 = math.rsqrt %32 : vector<16x1xf32>
      %34 = vector.broadcast %33 : vector<16x1xf32> to vector<16x32xf32>
      %35 = arith.mulf %30, %34 : vector<16x32xf32>
      %c0_21 = arith.constant 0 : index
      %c0_22 = arith.constant 0 : index
      %36 = vector.load %arg7[%c0_21, %c0_22] : memref<1x32xf32, #tpu.memory_space<vmem>>, vector<1x32xf32>
      %37 = vector.broadcast %36 : vector<1x32xf32> to vector<16x32xf32>
      %38 = arith.mulf %35, %37 : vector<16x32xf32>
      %c0_23 = arith.constant 0 : index
      %c0_24 = arith.constant 0 : index
      %39 = vector.load %arg8[%c0_23, %c0_24] : memref<1x32xf32, #tpu.memory_space<vmem>>, vector<1x32xf32>
      %40 = vector.broadcast %39 : vector<1x32xf32> to vector<16x32xf32>
      %41 = arith.addf %38, %40 : vector<16x32xf32>
      %c0_25 = arith.constant 0 : index
      %c0_26 = arith.constant 0 : index
      %42 = vector.load %arg9[%c0_25, %c0_26] : memref<16x32xf32, #tpu.memory_space<vmem>>, vector<16x32xf32>
      tpu.vector_store %arg9[%c0_25, %c0_26], %41 {strides = array<i32>} : memref<16x32xf32, #tpu.memory_space<vmem>>, vector<16x32xf32>,
    } else {
    }
    return
  }
  func.func @transform_0(%arg0: i32, %arg1: i32, %arg2: i32) -> (i32, i32) {
    %c0_i32 = arith.constant 0 : i32
    return %arg0, %arg2 : i32, i32
  }
  func.func @transform_1(%arg0: i32, %arg1: i32, %arg2: i32) -> (i32, i32) {
    %c0_i32 = arith.constant 0 : i32
    return %arg2, %arg1 : i32, i32
  }
  func.func @transform_2(%arg0: i32, %arg1: i32, %arg2: i32) -> (i32, i32) {
    %c0_i32 = arith.constant 0 : i32
    %c0_i32_0 = arith.constant 0 : i32
    return %c0_i32, %arg1 : i32, i32
  }
  func.func @transform_3(%arg0: i32, %arg1: i32, %arg2: i32) -> (i32, i32) {
    %c0_i32 = arith.constant 0 : i32
    return %arg0, %arg1 : i32, i32
  }
  func.func @transform_4(%arg0: i32, %arg1: i32, %arg2: i32) -> (i32, i32) {
    %c0_i32 = arith.constant 0 : i32
    %c0_i32_0 = arith.constant 0 : i32
    %c0_i32_1 = arith.constant 0 : i32
    return %c0_i32, %c0_i32_0 : i32, i32
  }
  func.func @transform_5(%arg0: i32, %arg1: i32, %arg2: i32) -> (i32, i32) {
    %c0_i32 = arith.constant 0 : i32
    %c0_i32_0 = arith.constant 0 : i32
    %c0_i32_1 = arith.constant 0 : i32
    return %c0_i32, %c0_i32_0 : i32, i32
  }
  func.func @transform_6(%arg0: i32, %arg1: i32, %arg2: i32) -> (i32, i32) {
    %c0_i32 = arith.constant 0 : i32
    return %arg0, %arg1 : i32, i32
  }
}

</mosaic_0001>

<llo_original>
// kernel: encoder_forward.10
$region0: #{encoder_forward.10}
  #allocation0 [shape = 'u32[]', space=smem, size = 0x4, offset = 0x4, fixed_abs, tag = 'smem constant byte address 0x4 - core index']
  #allocation1 [shape = 'u32[144,128]{1,0:T(1,128)}', space=vmem, size = 0x12000, scoped, tag = 'internal scratch']
  #allocation2 [shape = 'bf16[16,32]{1,0:T(8,128)(2,1)}', space=vmem, size = 0x1000, scoped, tag = 'scratch operand']
  %s0 = inlined_call_operand.vmem [shape: f32[16,32], index: 0, kind: input, shape index: {}]
  %s1 = inlined_call_operand.vmem [shape: f32[1,32], index: 1, kind: input, shape index: {}]
  %s2 = inlined_call_operand.vmem [shape: f32[1,32], index: 2, kind: input, shape index: {}]
  %s3 = inlined_call_operand.vmem [shape: bf16[32,96], index: 3, kind: input, shape index: {}]
  %s4 = inlined_call_operand.vmem [shape: f32[1,96], index: 4, kind: input, shape index: {}]
  %s5 = inlined_call_operand.vmem [shape: bf16[16,96], index: 5, kind: output, shape index: {}]
  %s6 = sld [smem:[#allocation0]]
  $region34: #{encoder_forward.10} parent=0
    _
  %s8 = ssub.s32 1, %s6
  %s9 = scalar_select 0, %s8, %s6
  // Predicated region
  $region2: #{encoder_forward.10} parent=0 // pred_check
    _
  $region3: #{encoder_forward.10} parent=0 // pred_check_branch
    %11 = sbr.rel (0) target = $region5
  $region4: #{encoder_forward.10} parent=0 // pred_region
    _
  $region5: #{encoder_forward.10} parent=0 // pred_fallthru
    _
  // Predicated region
  $region6: #{encoder_forward.10} parent=0 // pred_check
    _
  $region7: #{encoder_forward.10} parent=0 // pred_check_branch
    %13 = sbr.rel (0) target = $region9
  $region8: #{encoder_forward.10} parent=0 // pred_region
    _
  $region9: #{encoder_forward.10} parent=0 // pred_fallthru
    _
  // Predicated region
  $region10: #{encoder_forward.10} parent=0 // pred_check
    _
  $region11: #{encoder_forward.10} parent=0 // pred_check_branch
    %15 = sbr.rel (0) target = $region13
  $region12: #{encoder_forward.10} parent=0 // pred_region
    _
  $region13: #{encoder_forward.10} parent=0 // pred_fallthru
    _
  // Predicated region
  $region14: #{encoder_forward.10} parent=0 // pred_check
    _
  $region15: #{encoder_forward.10} parent=0 // pred_check_branch
    %17 = sbr.rel (0) target = $region17
  $region16: #{encoder_forward.10} parent=0 // pred_region
    _
  $region17: #{encoder_forward.10} parent=0 // pred_fallthru
    _
  // Predicated region
  $region18: #{encoder_forward.10} parent=0 // pred_check
    _
  $region19: #{encoder_forward.10} parent=0 // pred_check_branch
    %19 = sbr.rel (0) target = $region21
  $region20: #{encoder_forward.10} parent=0 // pred_region
    _
  $region21: #{encoder_forward.10} parent=0 // pred_fallthru
    _
  %p21 = scmp.eq.s32.totalorder 0, 0
  // Predicated region
  $region22: #{encoder_forward.10} parent=0 // pred_check
    %p22 = pneg %p21
  $region23: #{encoder_forward.10} parent=0 // pred_check_branch
    %24 = sbr.rel (%p22) target = $region25
  $region24: #{encoder_forward.10} parent=0 // pred_region
    %v25 = vld [vmem:[%s0] sm:$0xff]
    %v26 = vld [vmem:[%s0 + $0x8] sm:$0xff]
    %vm27 = vcmask 261120
    %v28 = vsel %vm27, %v25, 0.0
    %29 = vadd.xlane.f32.xlu0 %v28
    %v30 = vpop.xlane.xlu0 %29
    %v31 = vsel %vm27, %v26, 0.0
    %32 = vadd.xlane.f32.xlu0 %v31
    %v33 = vpop.xlane.xlu0 %32
    %v34 = vrcp.pop 32.0
    %v35 = vmul.f32 %v30, %v34
    %v36 = vmul.f32 %v33, %v34
    %v37 = vsub.f32 %v25, %v35
    %v38 = vsub.f32 %v26, %v36
    %v39 = vmul.f32 %v37, %v37
    %v40 = vmul.f32 %v38, %v38
    %v41 = vsel %vm27, %v39, 0.0
    %42 = vadd.xlane.f32.xlu0 %v41
    %v43 = vpop.xlane.xlu0 %42
    %v44 = vsel %vm27, %v40, 0.0
    %45 = vadd.xlane.f32.xlu0 %v44
    %v46 = vpop.xlane.xlu0 %45
    %v47 = vmul.f32 %v43, %v34
    %v48 = vmul.f32 %v46, %v34
    %v49 = vadd.f32 %v47, 1e-05
    %v50 = vadd.f32 %v48, 1e-05
    %v51 = vrsqrt.pop %v49
    %v52 = vrsqrt.pop %v50
    %v53 = vmul.f32 %v37, %v51
    %v54 = vmul.f32 %v38, %v52
    %v55 = vld [vmem:[%s1] sm:$0x1]
    %v57 = vlaneseq
    %v58 = vshrl.u32 %v57, 7
    %v59 = vsub.s32 0, %v58
    %v60 = vrot.slane %v55, %v59
    %v62 = vmul.f32 %v53, %v60
    %v63 = vmul.f32 %v54, %v60
    %v64 = vld [vmem:[%s2] sm:$0x1]
    %v66 = vlaneseq
    %v67 = vshrl.u32 %v66, 7
    %v68 = vsub.s32 0, %v67
    %v69 = vrot.slane %v64, %v68
    %v71 = vadd.f32 %v62, %v69
    %v72 = vadd.f32 %v63, %v69
    %v73 = vpack.c.bf16 %v72, %v71
    %v75 = vunpack.c.l.b16 %v73
    %v76 = vunpack.c.h.b16 %v73
    %v77 = vpack.c.b16 %v75, %v75
    %v78 = vpack.c.b16 %v76, %v76
    %vm81 = vcmask 257024
    %82 = vst.msk [vmem:[#allocation2] sm:$0xf] %vm81, %v77
    %83 = vst.msk [vmem:[#allocation2 + $0x4] sm:$0xf] %vm81, %v78
  $region25: #{encoder_forward.10} parent=0 // pred_fallthru
    _
  %v84 = vld [vmem:[#allocation2] sm:$0xf]
  %v85 = vld [vmem:[#allocation2 + $0x4] sm:$0xf]
  %v86 = vld [vmem:[%s3] sm:$0xf]
  %v87 = vld [vmem:[%s3 + $0x4] sm:$0xf]
  %v88 = vld [vmem:[%s3 + $0x8] sm:$0xf]
  %v89 = vld [vmem:[%s3 + $0xc] sm:$0xf]
  %v90 = vld [vmem:[%s4] sm:$0x1]
  %v92 = vlaneseq
  %v93 = vshrl.u32 %v92, 7
  %v94 = vsub.s32 0, %v93
  %v95 = vrot.slane %v90, %v94
  %v99 = vunpack.c.l.b16 %v84
  %v100 = vunpack.c.l.b16 %v85
  %v101 = vpack.c.b16 %v100, %v99
  %v106 = vunpack.c.l.b16 %v86
  %v107 = vunpack.c.l.b16 %v87
  %v108 = vunpack.c.l.b16 %v88
  %v109 = vunpack.c.l.b16 %v89
  %v110 = vpack.c.b16 %v107, %v106
  %v111 = vpack.c.b16 %v109, %v108
  %vm114 = vcmask 261120
  %v116 = vsel %vm114, %v101, 0
  %118 = vmatprep.subr.bf16.mxu0 0
  %119 = vmatpush1.bf16.msra.mxu0 0
  %120 = vmatprep.subr.bf16.mxu0 0
  %121 = vmatpush1.bf16.msra.mxu0 0
  %122 = vmatprep.subr.bf16.mxu0 0
  %123 = vmatpush1.bf16.msra.mxu0 0
  %124 = vmatprep.subr.bf16.mxu0 0
  %125 = vmatpush1.bf16.msra.mxu0 0
  %126 = vmatprep.subr.bf16.mxu0 0
  %127 = vmatpush1.bf16.msra.mxu0 0
  %128 = vmatprep.subr.bf16.mxu0 0
  %129 = vmatpush1.bf16.msra.mxu0 0
  %130 = vmatprep.subr.bf16.mxu0 0
  %131 = vmatpush1.bf16.msra.mxu0 %v111
  %132 = vmatprep.subr.bf16.mxu0 0
  %133 = vmatpush1.bf16.msra.mxu0 %v110
  %134 = vmatprep.subr.bf16.mxu0 0
  %135 = vmatpush2.bf16.msra.mxu0 0
  %136 = vmatprep.subr.bf16.mxu0 0
  %137 = vmatpush2.bf16.msra.mxu0 0
  %138 = vmatprep.subr.bf16.mxu0 0
  %139 = vmatpush2.bf16.msra.mxu0 0
  %140 = vmatprep.subr.bf16.mxu0 0
  %141 = vmatpush2.bf16.msra.mxu0 0
  %142 = vmatprep.subr.bf16.mxu0 0
  %143 = vmatpush2.bf16.msra.mxu0 0
  %144 = vmatprep.subr.bf16.mxu0 0
  %145 = vmatpush2.bf16.msra.mxu0 0
  %146 = vmatprep.subr.bf16.mxu0 0
  %147 = vmatpush2.bf16.msra.mxu0 0
  %148 = vmatprep.subr.bf16.mxu0 0
  %149 = vmatpush2.bf16.msra.mxu0 0
  %150 = vmatprep.mubr.bf16.mxu0 0
  %151 = vmatmul.mubr.bf16.gmra.mxu0 %v116
  %v152 = vpop.f32.mrf.mxu0
  %v153 = vadd.f32 %v95, %v152
  %v154 = vpop.f32.mrf.mxu0
  %v155 = vpop.f32.mrf.mxu0
  %v156 = vadd.f32 %v95, %v155
  %v157 = vpop.f32.mrf.mxu0
  %158 = vdwg.mxu0
  %v159 = vpack.c.bf16 %v156, %v153
  %v161 = vunpack.c.l.b16 %v159
  %v162 = vunpack.c.h.b16 %v159
  %v163 = vpack.c.b16 %v161, %v161
  %v164 = vpack.c.b16 %v162, %v162
  %vm167 = vcmask 781312
  %168 = vst.msk [vmem:[%s5] sm:$0xf] %vm167, %v163
  %169 = vst.msk [vmem:[%s5 + $0x4] sm:$0xf] %vm167, %v164
  // Predicated region
  $region26: #{encoder_forward.10} parent=0 // pred_check
    _
  $region27: #{encoder_forward.10} parent=0 // pred_check_branch
    %171 = sbr.rel (0) target = $region29
  $region28: #{encoder_forward.10} parent=0 // pred_region
    _
  $region29: #{encoder_forward.10} parent=0 // pred_fallthru
    _
  // Predicated region
  $region30: #{encoder_forward.10} parent=0 // pred_check
    _
  $region31: #{encoder_forward.10} parent=0 // pred_check_branch
    %173 = sbr.rel (0) target = $region33
  $region32: #{encoder_forward.10} parent=0 // pred_region
    _
  $region33: #{encoder_forward.10} parent=0 // pred_fallthru
    _

// kernel: encoder_forward.11
$region0: #{encoder_forward.11}
  #allocation0 [shape = 'u32[]', space=smem, size = 0x4, offset = 0x4, fixed_abs, tag = 'smem constant byte address 0x4 - core index']
  #allocation1 [shape = 'u32[144,128]{1,0:T(1,128)}', space=vmem, size = 0x12000, scoped, tag = 'internal scratch']
  %s0 = inlined_call_operand.vmem [shape: bf16[2,3,4,8,8], index: 0, kind: input, shape index: {}, may-alias: {0,1,2}]
  %s1 = inlined_call_operand.vmem [shape: bf16[2,3,4,8,8], index: 1, kind: input, shape index: {}, may-alias: {0,1,2}]
  %s2 = inlined_call_operand.vmem [shape: bf16[2,3,4,8,8], index: 2, kind: input, shape index: {}, may-alias: {0,1,2}]
  %s3 = inlined_call_operand.vmem [shape: bf16[2,8,8,8], index: 3, kind: input, shape index: {}]
  %s4 = inlined_call_operand.vmem [shape: bf16[2,8,8,8], index: 4, kind: input, shape index: {}]
  %s5 = inlined_call_operand.vmem [shape: f32[2,1,8], index: 5, kind: input, shape index: {}]
  %s6 = inlined_call_operand.vmem [shape: bf16[2,4,8,8], index: 6, kind: output, shape index: {}]
  %s7 = sld [smem:[#allocation0]]
  $region57: #{encoder_forward.11} parent=0
    _
  %s9 = ssub.s32 1, %s7
  %s10 = scalar_select 0, %s9, %s7
  loop: start=0, step=1, limit=10
  $region2: #{encoder_forward.11} parent=0 // loop_pre_header
    _
  $region3: #{encoder_forward.11} parent=0 // loop_header
    %s12 = sphi 0, %s16
    %p13 = scmp.ge.s32.totalorder %s12, 10
    %s19 = sphi 0, %s38
    %s20 = sphi 0, %s34
    %s21 = sphi 0, %s30
    %s22 = sphi 0, %s19
    %s23 = sphi 0, %s20
    %s24 = sphi 0, %s21
    %s25 = sphi 0, %s22
    %s26 = sphi 0, %s23
    %s27 = sphi 0, %s24
    %s45 = sphi 0, %s47
    %s48 = sphi 0, %s45
    %s49 = sphi 0, %s48
    %s65 = sphi 0, %s49
    %s73 = sphi 0, %s75
    %s76 = sphi 0, %s73
    %s77 = sphi 0, %s76
    %s93 = sphi 0, %s77
    %s101 = sphi 0, %s103
    %s104 = sphi 0, %s101
    %s105 = sphi 0, %s104
    %s121 = sphi 0, %s105
    %s129 = sphi 0, %s131
    %s132 = sphi 0, %s129
    %s133 = sphi 0, %s132
    %s149 = sphi 0, %s133
    %s157 = sphi 0, %s159
    %s160 = sphi 0, %s157
    %s161 = sphi 0, %s160
    %s177 = sphi 0, %s161
    %s183 = sphi 0, %s185
    %s186 = sphi 0, %s183
    %s187 = sphi 0, %s186
    %s203 = sphi 0, %s187
    %s213 = sphi 0, %s215
    %s216 = sphi 0, %s213
    %s217 = sphi 0, %s216
    %s233 = sphi 0, %s217
  $region4: #{encoder_forward.11} parent=0 // loop_header_branch
    %15 = sbr.rel (%p13) target = $region8
  $region5: #{encoder_forward.11} parent=0 // loop_body
    %s17 = ssub.s32 %s12, 1
    %s18 = ssub.s32 %s12, 2
    %s28 = sadd.s32 1, %s21
    %p29 = scmp.ge.s32.totalorder %s28, 4
    %s30 = scalar_select %p29, 0, %s28
    %s31 = sadd.s32 1, %s20
    %s32 = scalar_select %p29, %s31, %s20
    %p33 = scmp.ge.s32.totalorder %s32, 1
    %s34 = scalar_select %p33, 0, %s32
    %s35 = sadd.s32 1, %s19
    %s36 = scalar_select %p33, %s35, %s19
    %p37 = scmp.ge.s32.totalorder %s36, 2
    %s38 = scalar_select %p37, 0, %s36
    %s39 = ssub.s32 %s19, %s38
    %s40 = ssub.s32 %s21, %s30
    %s41 = sor.u32 %s39, %s40
    %s42 = ssub.s32 %s20, %s34
    %s43 = sor.u32 %s41, %s42
    %p44 = scmp.eq.s32.totalorder %s43, 0
    %s46 = sadd.s32 %s45, 1
    %s47 = scalar_select %p44, %s45, %s46
    %p50 = pneg %p44
    %p51 = scmp.eq.s32.totalorder %s12, 7
    %p52 = por %p50, %p51
    %p53 = scmp.ne.s32.totalorder %s45, %s48
    %p54 = scmp.eq.s32.totalorder %s12, 0
    %p55 = por %p53, %p54
    %p56 = scmp.ne.s32.totalorder %s45, %s48
    %p57 = scmp.eq.s32.totalorder %s17, 7
    %p58 = por %p56, %p57
    %p59 = scmp.ne.s32.totalorder %s48, %s49
    %p60 = scmp.eq.s32.totalorder %s17, 0
    %p61 = por %p59, %p60
    %p62 = scmp.ne.s32.totalorder %s48, %s49
    %p63 = scmp.eq.s32.totalorder %s18, 7
    %p64 = por %p62, %p63
    %p66 = scmp.ne.s32.totalorder %s49, %s65
    %p67 = scmp.eq.s32.totalorder %s18, 0
    %p68 = por %p66, %p67
    %s69 = ssub.s32 %s19, %s38
    %s70 = ssub.s32 %s21, %s30
    %s71 = sor.u32 %s69, %s70
    %p72 = scmp.eq.s32.totalorder %s71, 0
    %s74 = sadd.s32 %s73, 1
    %s75 = scalar_select %p72, %s73, %s74
    %p78 = pneg %p72
    %p79 = scmp.eq.s32.totalorder %s12, 7
    %p80 = por %p78, %p79
    %p81 = scmp.ne.s32.totalorder %s73, %s76
    %p82 = scmp.eq.s32.totalorder %s12, 0
    %p83 = por %p81, %p82
    %p84 = scmp.ne.s32.totalorder %s73, %s76
    %p85 = scmp.eq.s32.totalorder %s17, 7
    %p86 = por %p84, %p85
    %p87 = scmp.ne.s32.totalorder %s76, %s77
    %p88 = scmp.eq.s32.totalorder %s17, 0
    %p89 = por %p87, %p88
    %p90 = scmp.ne.s32.totalorder %s76, %s77
    %p91 = scmp.eq.s32.totalorder %s18, 7
    %p92 = por %p90, %p91
    %p94 = scmp.ne.s32.totalorder %s77, %s93
    %p95 = scmp.eq.s32.totalorder %s18, 0
    %p96 = por %p94, %p95
    %s97 = ssub.s32 %s19, %s38
    %s98 = ssub.s32 %s21, %s30
    %s99 = sor.u32 %s97, %s98
    %p100 = scmp.eq.s32.totalorder %s99, 0
    %s102 = sadd.s32 %s101, 1
    %s103 = scalar_select %p100, %s101, %s102
    %p106 = pneg %p100
    %p107 = scmp.eq.s32.totalorder %s12, 7
    %p108 = por %p106, %p107
    %p109 = scmp.ne.s32.totalorder %s101, %s104
    %p110 = scmp.eq.s32.totalorder %s12, 0
    %p111 = por %p109, %p110
    %p112 = scmp.ne.s32.totalorder %s101, %s104
    %p113 = scmp.eq.s32.totalorder %s17, 7
    %p114 = por %p112, %p113
    %p115 = scmp.ne.s32.totalorder %s104, %s105
    %p116 = scmp.eq.s32.totalorder %s17, 0
    %p117 = por %p115, %p116
    %p118 = scmp.ne.s32.totalorder %s104, %s105
    %p119 = scmp.eq.s32.totalorder %s18, 7
    %p120 = por %p118, %p119
    %p122 = scmp.ne.s32.totalorder %s105, %s121
    %p123 = scmp.eq.s32.totalorder %s18, 0
    %p124 = por %p122, %p123
    %s125 = ssub.s32 %s19, %s38
    %s126 = ssub.s32 %s20, %s34
    %s127 = sor.u32 %s125, %s126
    %p128 = scmp.eq.s32.totalorder %s127, 0
    %s130 = sadd.s32 %s129, 1
    %s131 = scalar_select %p128, %s129, %s130
    %p134 = pneg %p128
    %p135 = scmp.eq.s32.totalorder %s12, 7
    %p136 = por %p134, %p135
    %p137 = scmp.ne.s32.totalorder %s129, %s132
    %p138 = scmp.eq.s32.totalorder %s12, 0
    %p139 = por %p137, %p138
    %p140 = scmp.ne.s32.totalorder %s129, %s132
    %p141 = scmp.eq.s32.totalorder %s17, 7
    %p142 = por %p140, %p141
    %p143 = scmp.ne.s32.totalorder %s132, %s133
    %p144 = scmp.eq.s32.totalorder %s17, 0
    %p145 = por %p143, %p144
    %p146 = scmp.ne.s32.totalorder %s132, %s133
    %p147 = scmp.eq.s32.totalorder %s18, 7
    %p148 = por %p146, %p147
    %p150 = scmp.ne.s32.totalorder %s133, %s149
    %p151 = scmp.eq.s32.totalorder %s18, 0
    %p152 = por %p150, %p151
    %s153 = ssub.s32 %s19, %s38
    %s154 = ssub.s32 %s20, %s34
    %s155 = sor.u32 %s153, %s154
    %p156 = scmp.eq.s32.totalorder %s155, 0
    %s158 = sadd.s32 %s157, 1
    %s159 = scalar_select %p156, %s157, %s158
    %p162 = pneg %p156
    %p163 = scmp.eq.s32.totalorder %s12, 7
    %p164 = por %p162, %p163
    %p165 = scmp.ne.s32.totalorder %s157, %s160
    %p166 = scmp.eq.s32.totalorder %s12, 0
    %p167 = por %p165, %p166
    %p168 = scmp.ne.s32.totalorder %s157, %s160
    %p169 = scmp.eq.s32.totalorder %s17, 7
    %p170 = por %p168, %p169
    %p171 = scmp.ne.s32.totalorder %s160, %s161
    %p172 = scmp.eq.s32.totalorder %s17, 0
    %p173 = por %p171, %p172
    %p174 = scmp.ne.s32.totalorder %s160, %s161
    %p175 = scmp.eq.s32.totalorder %s18, 7
    %p176 = por %p174, %p175
    %p178 = scmp.ne.s32.totalorder %s161, %s177
    %p179 = scmp.eq.s32.totalorder %s18, 0
    %p180 = por %p178, %p179
    %s181 = ssub.s32 %s19, %s38
    %p182 = scmp.eq.s32.totalorder %s181, 0
    %s184 = sadd.s32 %s183, 1
    %s185 = scalar_select %p182, %s183, %s184
    %p188 = pneg %p182
    %p189 = scmp.eq.s32.totalorder %s12, 7
    %p190 = por %p188, %p189
    %p191 = scmp.ne.s32.totalorder %s183, %s186
    %p192 = scmp.eq.s32.totalorder %s12, 0
    %p193 = por %p191, %p192
    %p194 = scmp.ne.s32.totalorder %s183, %s186
    %p195 = scmp.eq.s32.totalorder %s17, 7
    %p196 = por %p194, %p195
    %p197 = scmp.ne.s32.totalorder %s186, %s187
    %p198 = scmp.eq.s32.totalorder %s17, 0
    %p199 = por %p197, %p198
    %p200 = scmp.ne.s32.totalorder %s186, %s187
    %p201 = scmp.eq.s32.totalorder %s18, 7
    %p202 = por %p200, %p201
    %p204 = scmp.ne.s32.totalorder %s187, %s203
    %p205 = scmp.eq.s32.totalorder %s18, 0
    %p206 = por %p204, %p205
    %s207 = ssub.s32 %s19, %s38
    %s208 = ssub.s32 %s21, %s30
    %s209 = sor.u32 %s207, %s208
    %s210 = ssub.s32 %s20, %s34
    %s211 = sor.u32 %s209, %s210
    %p212 = scmp.eq.s32.totalorder %s211, 0
    %s214 = sadd.s32 %s213, 1
    %s215 = scalar_select %p212, %s213, %s214
    %p218 = pneg %p212
    %p219 = scmp.eq.s32.totalorder %s12, 7
    %p220 = por %p218, %p219
    %p221 = scmp.ne.s32.totalorder %s213, %s216
    %p222 = scmp.eq.s32.totalorder %s12, 0
    %p223 = por %p221, %p222
    %p224 = scmp.ne.s32.totalorder %s213, %s216
    %p225 = scmp.eq.s32.totalorder %s17, 7
    %p226 = por %p224, %p225
    %p227 = scmp.ne.s32.totalorder %s216, %s217
    %p228 = scmp.eq.s32.totalorder %s17, 0
    %p229 = por %p227, %p228
    %p230 = scmp.ne.s32.totalorder %s216, %s217
    %p231 = scmp.eq.s32.totalorder %s18, 7
    %p232 = por %p230, %p231
    %p234 = scmp.ne.s32.totalorder %s217, %s233
    %p235 = scmp.eq.s32.totalorder %s18, 0
    %p236 = por %p234, %p235
    %p237 = scmp.le.s32.totalorder 1, %s12
    %p238 = scmp.lt.s32.totalorder %s12, 9
    %p239 = pnand %p237, %p238
    %p240 = pneg %p239
    // Predicated region
    $region9: #{encoder_forward.11} parent=5 // pred_check
      _
    $region10: #{encoder_forward.11} parent=5 // pred_check_branch
      %242 = sbr.rel (%p239) target = $region12
    $region11: #{encoder_forward.11} parent=5 // pred_region
      %s243 = ssub.s32 %s12, 1
    $region12: #{encoder_forward.11} parent=5 // pred_fallthru
      _
    %p244 = scmp.lt.s32.totalorder %s12, 8
    // Predicated region
    $region13: #{encoder_forward.11} parent=5 // pred_check
      %p245 = pneg %p244
    $region14: #{encoder_forward.11} parent=5 // pred_check_branch
      %247 = sbr.rel (%p245) target = $region16
    $region15: #{encoder_forward.11} parent=5 // pred_region
      // Predicated region
      $region17: #{encoder_forward.11} parent=15 // pred_check
        %p248 = pneg %p55
      $region18: #{encoder_forward.11} parent=15 // pred_check_branch
        %250 = sbr.rel (%p248) target = $region20
      $region19: #{encoder_forward.11} parent=15 // pred_region
        %p251 = scmp.lt.s32.totalorder %s19, 1
        %s252 = scalar_select %p251, %s19, 1
        %p253 = scmp.lt.s32.totalorder %s21, 3
        %s254 = scalar_select %p253, %s21, 3
        %p255 = scmp.lt.s32.totalorder %s20, 0
        %s256 = scalar_select %p255, %s20, 0
        %s257 = sadd.s32 %s256, %s254
        %s258 = smul.addr %s252, 12
        %s259 = sadd.s32 %s257, %s258
        %s260 = smul.addr %s259, 4
        %s261 = scalar_lea.vmem %s0, %s260
      $region20: #{encoder_forward.11} parent=15 // pred_fallthru
        _
      // Predicated region
      $region21: #{encoder_forward.11} parent=15 // pred_check
        %p262 = pneg %p83
      $region22: #{encoder_forward.11} parent=15 // pred_check_branch
        %264 = sbr.rel (%p262) target = $region24
      $region23: #{encoder_forward.11} parent=15 // pred_region
        %p265 = scmp.lt.s32.totalorder %s19, 1
        %s266 = scalar_select %p265, %s19, 1
        %p267 = scmp.lt.s32.totalorder %s21, 3
        %s268 = scalar_select %p267, %s21, 3
        %s269 = sadd.s32 %s268, 4
        %s270 = smul.addr %s266, 12
        %s271 = sadd.s32 %s269, %s270
        %s272 = smul.addr %s271, 4
        %s273 = scalar_lea.vmem %s1, %s272
      $region24: #{encoder_forward.11} parent=15 // pred_fallthru
        _
      // Predicated region
      $region25: #{encoder_forward.11} parent=15 // pred_check
        %p274 = pneg %p111
      $region26: #{encoder_forward.11} parent=15 // pred_check_branch
        %276 = sbr.rel (%p274) target = $region28
      $region27: #{encoder_forward.11} parent=15 // pred_region
        %p277 = scmp.lt.s32.totalorder %s19, 1
        %s278 = scalar_select %p277, %s19, 1
        %p279 = scmp.lt.s32.totalorder %s21, 3
        %s280 = scalar_select %p279, %s21, 3
        %s281 = sadd.s32 %s280, 8
        %s282 = smul.addr %s278, 12
        %s283 = sadd.s32 %s281, %s282
        %s284 = smul.addr %s283, 4
        %s285 = scalar_lea.vmem %s2, %s284
      $region28: #{encoder_forward.11} parent=15 // pred_fallthru
        _
      // Predicated region
      $region29: #{encoder_forward.11} parent=15 // pred_check
        %p286 = pneg %p139
      $region30: #{encoder_forward.11} parent=15 // pred_check_branch
        %288 = sbr.rel (%p286) target = $region32
      $region31: #{encoder_forward.11} parent=15 // pred_region
        %s289 = smul.u32 8, %s20
        %p290 = scmp.lt.s32.totalorder %s19, 1
        %s291 = scalar_select %p290, %s19, 1
        %p292 = scmp.lt.s32.totalorder %s289, 7
        %s293 = scalar_select %p292, %s289, 7
        %s294 = smul.addr %s291, 8
        %s295 = sadd.s32 %s293, %s294
        %s296 = smul.addr %s295, 4
        %s297 = scalar_lea.vmem %s3, %s296
        %s298 = smul.u32 8, %s20
      $region32: #{encoder_forward.11} parent=15 // pred_fallthru
        _
      // Predicated region
      $region33: #{encoder_forward.11} parent=15 // pred_check
        %p299 = pneg %p167
      $region34: #{encoder_forward.11} parent=15 // pred_check_branch
        %301 = sbr.rel (%p299) target = $region36
      $region35: #{encoder_forward.11} parent=15 // pred_region
        %s302 = smul.u32 8, %s20
        %p303 = scmp.lt.s32.totalorder %s19, 1
        %s304 = scalar_select %p303, %s19, 1
        %p305 = scmp.lt.s32.totalorder %s302, 7
        %s306 = scalar_select %p305, %s302, 7
        %s307 = smul.addr %s304, 8
        %s308 = sadd.s32 %s306, %s307
        %s309 = smul.addr %s308, 4
        %s310 = scalar_lea.vmem %s4, %s309
        %s311 = smul.u32 8, %s20
      $region36: #{encoder_forward.11} parent=15 // pred_fallthru
        _
      // Predicated region
      $region37: #{encoder_forward.11} parent=15 // pred_check
        %p312 = pneg %p193
      $region38: #{encoder_forward.11} parent=15 // pred_check_branch
        %314 = sbr.rel (%p312) target = $region40
      $region39: #{encoder_forward.11} parent=15 // pred_region
        %p315 = scmp.lt.s32.totalorder %s19, 1
        %s316 = scalar_select %p315, %s19, 1
        %s317 = scalar_lea.vmem %s5, %s316
      $region40: #{encoder_forward.11} parent=15 // pred_fallthru
        _
    $region16: #{encoder_forward.11} parent=5 // pred_fallthru
      _
    %p318 = scmp.le.s32.totalorder 1, %s12
    %p319 = scmp.lt.s32.totalorder %s12, 9
    %p320 = pnand %p318, %p319
    %p321 = pneg %p320
    // Predicated region
    $region41: #{encoder_forward.11} parent=5 // pred_check
      _
    $region42: #{encoder_forward.11} parent=5 // pred_check_branch
      %323 = sbr.rel (%p320) target = $region44
    $region43: #{encoder_forward.11} parent=5 // pred_region
      %s324 = ssub.s32 %s12, 1
      %p325 = scmp.lt.s32.totalorder %s22, 1
      %s326 = scalar_select %p325, %s22, 1
      %p327 = scmp.lt.s32.totalorder %s24, 3
      %s328 = scalar_select %p327, %s24, 3
      %p329 = scmp.lt.s32.totalorder %s23, 0
      %s330 = scalar_select %p329, %s23, 0
      %s331 = sadd.s32 %s330, %s328
      %s332 = smul.addr %s326, 12
      %s333 = sadd.s32 %s331, %s332
      %s334 = smul.addr %s333, 4
      %s335 = scalar_lea.vmem %s0, %s334
      %p336 = pneg %p61
      %p337 = pneg %p58
      %p338 = scmp.lt.s32.totalorder %s22, 1
      %s339 = scalar_select %p338, %s22, 1
      %p340 = scmp.lt.s32.totalorder %s24, 3
      %s341 = scalar_select %p340, %s24, 3
      %s342 = sadd.s32 %s341, 4
      %s343 = smul.addr %s339, 12
      %s344 = sadd.s32 %s342, %s343
      %s345 = smul.addr %s344, 4
      %s346 = scalar_lea.vmem %s1, %s345
      %p347 = pneg %p89
      %p348 = pneg %p86
      %p349 = scmp.lt.s32.totalorder %s22, 1
      %s350 = scalar_select %p349, %s22, 1
      %p351 = scmp.lt.s32.totalorder %s24, 3
      %s352 = scalar_select %p351, %s24, 3
      %s353 = sadd.s32 %s352, 8
      %s354 = smul.addr %s350, 12
      %s355 = sadd.s32 %s353, %s354
      %s356 = smul.addr %s355, 4
      %s357 = scalar_lea.vmem %s2, %s356
      %p358 = pneg %p117
      %p359 = pneg %p114
      %s360 = smul.u32 8, %s23
      %p361 = scmp.lt.s32.totalorder %s22, 1
      %s362 = scalar_select %p361, %s22, 1
      %p363 = scmp.lt.s32.totalorder %s360, 7
      %s364 = scalar_select %p363, %s360, 7
      %s365 = smul.addr %s362, 8
      %s366 = sadd.s32 %s364, %s365
      %s367 = smul.addr %s366, 4
      %s368 = scalar_lea.vmem %s3, %s367
      %p369 = pneg %p145
      %p370 = pneg %p142
      %s371 = smul.u32 8, %s23
      %p372 = scmp.lt.s32.totalorder %s22, 1
      %s373 = scalar_select %p372, %s22, 1
      %p374 = scmp.lt.s32.totalorder %s371, 7
      %s375 = scalar_select %p374, %s371, 7
      %s376 = smul.addr %s373, 8
      %s377 = sadd.s32 %s375, %s376
      %s378 = smul.addr %s377, 4
      %s379 = scalar_lea.vmem %s4, %s378
      %p380 = pneg %p173
      %p381 = pneg %p170
      %p382 = scmp.lt.s32.totalorder %s22, 1
      %s383 = scalar_select %p382, %s22, 1
      %s384 = scalar_lea.vmem %s5, %s383
      %p385 = pneg %p199
      %p386 = pneg %p196
      %p387 = pneg %p229
      %p388 = pneg %p226
      %p389 = scmp.lt.s32.totalorder %s22, 1
      %s390 = scalar_select %p389, %s22, 1
      %p391 = scmp.lt.s32.totalorder %s24, 3
      %s392 = scalar_select %p391, %s24, 3
      %p393 = scmp.lt.s32.totalorder %s23, 0
      %s394 = scalar_select %p393, %s23, 0
      %s395 = sadd.s32 %s394, %s392
      %s396 = smul.addr %s390, 4
      %s397 = sadd.s32 %s395, %s396
      %s398 = smul.addr %s397, 4
      %s399 = scalar_lea.vmem %s6, %s398
      %p400 = scmp.lt.s32.totalorder %s22, 1
      %s401 = scalar_select %p400, %s22, 1
      %p402 = scmp.lt.s32.totalorder %s24, 3
      %s403 = scalar_select %p402, %s24, 3
      %p404 = scmp.lt.s32.totalorder %s23, 0
      %s405 = scalar_select %p404, %s23, 0
      %s406 = sadd.s32 %s405, %s403
      %s407 = smul.addr %s401, 12
      %s408 = sadd.s32 %s406, %s407
      %s409 = smul.addr %s408, 4
      %s410 = scalar_lea.vmem %s0, %s409
      %p411 = scmp.lt.s32.totalorder %s22, 1
      %s412 = scalar_select %p411, %s22, 1
      %p413 = scmp.lt.s32.totalorder %s24, 3
      %s414 = scalar_select %p413, %s24, 3
      %s415 = sadd.s32 %s414, 4
      %s416 = smul.addr %s412, 12
      %s417 = sadd.s32 %s415, %s416
      %s418 = smul.addr %s417, 4
      %s419 = scalar_lea.vmem %s1, %s418
      %p420 = scmp.lt.s32.totalorder %s22, 1
      %s421 = scalar_select %p420, %s22, 1
      %p422 = scmp.lt.s32.totalorder %s24, 3
      %s423 = scalar_select %p422, %s24, 3
      %s424 = sadd.s32 %s423, 8
      %s425 = smul.addr %s421, 12
      %s426 = sadd.s32 %s424, %s425
      %s427 = smul.addr %s426, 4
      %s428 = scalar_lea.vmem %s2, %s427
      %s429 = smul.u32 8, %s23
      %p430 = scmp.lt.s32.totalorder %s22, 1
      %s431 = scalar_select %p430, %s22, 1
      %p432 = scmp.lt.s32.totalorder %s429, 7
      %s433 = scalar_select %p432, %s429, 7
      %s434 = smul.addr %s431, 8
      %s435 = sadd.s32 %s433, %s434
      %s436 = smul.addr %s435, 4
      %s437 = scalar_lea.vmem %s3, %s436
      %s438 = smul.u32 8, %s23
      %s439 = smul.u32 8, %s23
      %p440 = scmp.lt.s32.totalorder %s22, 1
      %s441 = scalar_select %p440, %s22, 1
      %p442 = scmp.lt.s32.totalorder %s439, 7
      %s443 = scalar_select %p442, %s439, 7
      %s444 = smul.addr %s441, 8
      %s445 = sadd.s32 %s443, %s444
      %s446 = smul.addr %s445, 4
      %s447 = scalar_lea.vmem %s4, %s446
      %s448 = smul.u32 8, %s23
      %p449 = scmp.lt.s32.totalorder %s22, 1
      %s450 = scalar_select %p449, %s22, 1
      %s451 = scalar_lea.vmem %s5, %s450
      %p452 = scmp.lt.s32.totalorder %s22, 1
      %s453 = scalar_select %p452, %s22, 1
      %p454 = scmp.lt.s32.totalorder %s24, 3
      %s455 = scalar_select %p454, %s24, 3
      %p456 = scmp.lt.s32.totalorder %s23, 0
      %s457 = scalar_select %p456, %s23, 0
      %s458 = sadd.s32 %s457, %s455
      %s459 = smul.addr %s453, 4
      %s460 = sadd.s32 %s458, %s459
      %s461 = smul.addr %s460, 4
      %s462 = scalar_lea.vmem %s6, %s461
      %v464 = vld [vmem:[%s410] sm:$0xf]
      %v465 = vld [vmem:[%s419] sm:$0xf]
      %v466 = vld [vmem:[%s428] sm:$0xf]
      %v467 = vld [vmem:[%s451] sm:$0x1]
      %vm468 = vcmp.gt.f32.partialorder %v467, 0.0
      %v469 = vunpack.c.l.bf16 %v464
      %v470 = vlaneseq
      %v471 = vshrl.u32 %v470, 7
      %v472 = vsub.s32 0, %v471
      %v473 = vrot.slane %v469, %v472
      %475 = vbcast.lane.b32.xlu0 %v473, 256
      %v476 = vpop.permute.xlu0 %475
      %v477 = vlaneseq
      %v478 = vshrl.u32 %v477, 7
      %v479 = vsub.s32 1, %v478
      %v480 = vrot.slane %v469, %v479
      %482 = vbcast.lane.b32.xlu0 %v480, 256
      %v483 = vpop.permute.xlu0 %482
      %v484 = vlaneseq
      %v485 = vshrl.u32 %v484, 7
      %v486 = vsub.s32 2, %v485
      %v487 = vrot.slane %v469, %v486
      %489 = vbcast.lane.b32.xlu0 %v487, 256
      %v490 = vpop.permute.xlu0 %489
      %v491 = vlaneseq
      %v492 = vshrl.u32 %v491, 7
      %v493 = vsub.s32 3, %v492
      %v494 = vrot.slane %v469, %v493
      %496 = vbcast.lane.b32.xlu0 %v494, 256
      %v497 = vpop.permute.xlu0 %496
      %v498 = vlaneseq
      %v499 = vshrl.u32 %v498, 7
      %v500 = vsub.s32 4, %v499
      %v501 = vrot.slane %v469, %v500
      %503 = vbcast.lane.b32.xlu0 %v501, 256
      %v504 = vpop.permute.xlu0 %503
      %v505 = vlaneseq
      %v506 = vshrl.u32 %v505, 7
      %v507 = vsub.s32 5, %v506
      %v508 = vrot.slane %v469, %v507
      %510 = vbcast.lane.b32.xlu0 %v508, 256
      %v511 = vpop.permute.xlu0 %510
      %v512 = vlaneseq
      %v513 = vshrl.u32 %v512, 7
      %v514 = vsub.s32 6, %v513
      %v515 = vrot.slane %v469, %v514
      %517 = vbcast.lane.b32.xlu0 %v515, 256
      %v518 = vpop.permute.xlu0 %517
      %v519 = vlaneseq
      %v520 = vshrl.u32 %v519, 7
      %v521 = vsub.s32 7, %v520
      %v522 = vrot.slane %v469, %v521
      %524 = vbcast.lane.b32.xlu0 %v522, 256
      %v525 = vpop.permute.xlu0 %524
      %v526 = vld [vmem:[%s437] sm:$0xf]
      %v527 = vld [vmem:[%s437 + $0x4] sm:$0xf]
      %v528 = vld [vmem:[%s437 + $0x8] sm:$0xf]
      %v529 = vld [vmem:[%s437 + $0xc] sm:$0xf]
      %v530 = vld [vmem:[%s437 + $0x10] sm:$0xf]
      %v531 = vld [vmem:[%s437 + $0x14] sm:$0xf]
      %v532 = vld [vmem:[%s437 + $0x18] sm:$0xf]
      %v533 = vld [vmem:[%s437 + $0x1c] sm:$0xf]
      %v534 = vunpack.c.l.bf16 %v526
      %v535 = vunpack.c.l.bf16 %v527
      %v536 = vunpack.c.l.bf16 %v528
      %v537 = vunpack.c.l.bf16 %v529
      %v538 = vunpack.c.l.bf16 %v530
      %v539 = vunpack.c.l.bf16 %v531
      %v540 = vunpack.c.l.bf16 %v532
      %v541 = vunpack.c.l.bf16 %v533
      %v542 = vmul.f32 %v476, %v534
      %v543 = vmul.f32 %v483, %v535
      %v544 = vmul.f32 %v490, %v536
      %v545 = vmul.f32 %v497, %v537
      %v546 = vmul.f32 %v504, %v538
      %v547 = vmul.f32 %v511, %v539
      %v548 = vmul.f32 %v518, %v540
      %v549 = vmul.f32 %v525, %v541
      %vm550 = vcmask 64512
      %v551 = vsel %vm550, %v542, 0.0
      %v552 = vrot.slane %v551, 4
      %v553 = vadd.f32 %v551, %v552
      %v554 = vrot.slane %v553, 2
      %v555 = vadd.f32 %v553, %v554
      %v556 = vrot.slane %v555, 1
      %v557 = vadd.f32 %v555, %v556
      %v558 = vsel %vm550, %v543, 0.0
      %v559 = vrot.slane %v558, 4
      %v560 = vadd.f32 %v558, %v559
      %v561 = vrot.slane %v560, 2
      %v562 = vadd.f32 %v560, %v561
      %v563 = vrot.slane %v562, 1
      %v564 = vadd.f32 %v562, %v563
      %v565 = vsel %vm550, %v544, 0.0
      %v566 = vrot.slane %v565, 4
      %v567 = vadd.f32 %v565, %v566
      %v568 = vrot.slane %v567, 2
      %v569 = vadd.f32 %v567, %v568
      %v570 = vrot.slane %v569, 1
      %v571 = vadd.f32 %v569, %v570
      %v572 = vsel %vm550, %v545, 0.0
      %v573 = vrot.slane %v572, 4
      %v574 = vadd.f32 %v572, %v573
      %v575 = vrot.slane %v574, 2
      %v576 = vadd.f32 %v574, %v575
      %v577 = vrot.slane %v576, 1
      %v578 = vadd.f32 %v576, %v577
      %v579 = vsel %vm550, %v546, 0.0
      %v580 = vrot.slane %v579, 4
      %v581 = vadd.f32 %v579, %v580
      %v582 = vrot.slane %v581, 2
      %v583 = vadd.f32 %v581, %v582
      %v584 = vrot.slane %v583, 1
      %v585 = vadd.f32 %v583, %v584
      %v586 = vsel %vm550, %v547, 0.0
      %v587 = vrot.slane %v586, 4
      %v588 = vadd.f32 %v586, %v587
      %v589 = vrot.slane %v588, 2
      %v590 = vadd.f32 %v588, %v589
      %v591 = vrot.slane %v590, 1
      %v592 = vadd.f32 %v590, %v591
      %v593 = vsel %vm550, %v548, 0.0
      %v594 = vrot.slane %v593, 4
      %v595 = vadd.f32 %v593, %v594
      %v596 = vrot.slane %v595, 2
      %v597 = vadd.f32 %v595, %v596
      %v598 = vrot.slane %v597, 1
      %v599 = vadd.f32 %v597, %v598
      %v600 = vsel %vm550, %v549, 0.0
      %v601 = vrot.slane %v600, 4
      %v602 = vadd.f32 %v600, %v601
      %v603 = vrot.slane %v602, 2
      %v604 = vadd.f32 %v602, %v603
      %v605 = vrot.slane %v604, 1
      %v606 = vadd.f32 %v604, %v605
      %vm615 = vcmask 1041409
      %v616 = vsel %vm615, %v564, %v557
      %vm617 = vcmask 1042434
      %v618 = vsel %vm617, %v571, %v616
      %vm619 = vcmask 1043459
      %v620 = vsel %vm619, %v578, %v618
      %vm621 = vcmask 1044484
      %v622 = vsel %vm621, %v585, %v620
      %vm623 = vcmask 1045509
      %v624 = vsel %vm623, %v592, %v622
      %vm625 = vcmask 1046534
      %v626 = vsel %vm625, %v599, %v624
      %vm627 = vcmask 1047559
      %v628 = vsel %vm627, %v606, %v626
      %v631 = vsel %vm550, %v464, 0
      %v634 = vsel %vm550, %v465, 0
      %636 = vmatprep.subr.bf16.mxu0 0
      %637 = vmatpush1.bf16.xpose.msra.mxu0 0
      %638 = vmatprep.subr.bf16.mxu0 0
      %639 = vmatpush1.bf16.xpose.msra.mxu0 0
      %640 = vmatprep.subr.bf16.mxu0 0
      %641 = vmatpush1.bf16.xpose.msra.mxu0 0
      %642 = vmatprep.subr.bf16.mxu0 0
      %643 = vmatpush1.bf16.xpose.msra.mxu0 0
      %644 = vmatprep.subr.bf16.mxu0 0
      %645 = vmatpush1.bf16.xpose.msra.mxu0 0
      %646 = vmatprep.subr.bf16.mxu0 0
      %647 = vmatpush1.bf16.xpose.msra.mxu0 0
      %648 = vmatprep.subr.bf16.mxu0 0
      %649 = vmatpush1.bf16.xpose.msra.mxu0 0
      %650 = vmatprep.subr.bf16.mxu0 0
      %651 = vmatpush1.bf16.xpose.msra.mxu0 %v634
      %652 = vmatprep.subr.bf16.mxu0 0
      %653 = vmatpush2.bf16.xpose.msra.mxu0 0
      %654 = vmatprep.subr.bf16.mxu0 0
      %655 = vmatpush2.bf16.xpose.msra.mxu0 0
      %656 = vmatprep.subr.bf16.mxu0 0
      %657 = vmatpush2.bf16.xpose.msra.mxu0 0
      %658 = vmatprep.subr.bf16.mxu0 0
      %659 = vmatpush2.bf16.xpose.msra.mxu0 0
      %660 = vmatprep.subr.bf16.mxu0 0
      %661 = vmatpush2.bf16.xpose.msra.mxu0 0
      %662 = vmatprep.subr.bf16.mxu0 0
      %663 = vmatpush2.bf16.xpose.msra.mxu0 0
      %664 = vmatprep.subr.bf16.mxu0 0
      %665 = vmatpush2.bf16.xpose.msra.mxu0 0
      %666 = vmatprep.subr.bf16.mxu0 0
      %667 = vmatpush2.bf16.xpose.msra.mxu0 0
      %668 = vmatprep.mubr.bf16.mxu0 0
      %669 = vmatmul.mubr.bf16.gmra.mxu0 %v631
      %v670 = vpop.f32.mrf.mxu0
      %v671 = vadd.f32 %v628, %v670
      %v672 = vpop.f32.mrf.mxu0
      %v673 = vpop.f32.mrf.mxu0
      %v674 = vpop.f32.mrf.mxu0
      %675 = vdwg.mxu0
      %v676 = vmul.f32 %v671, 0.35355338
      %v677 = vsel %vm468, 1, 0
      %v678 = vlaneseq
      %v679 = vshrl.u32 %v678, 7
      %v680 = vsub.s32 0, %v679
      %v681 = vrot.slane %v677, %v680
      %vm682 = vcmp.eq.s32.totalorder %v681, 1
      %v683 = vsel %vm682, %v676, -1e+09
      %v684 = vsel %vm550, %v683, -inf
      %685 = vmax.xlane.f32.xlu0 %v684
      %v686 = vpop.xlane.xlu0 %685
      %v687 = vsub.f32 %v683, %v686
      %v688 = vmul.f32 %v687, 1.442695
      %v689 = vpow.pop %v688
      %v690 = vsel %vm550, %v689, 0.0
      %691 = vadd.xlane.f32.xlu0 %v690
      %v692 = vpop.xlane.xlu0 %691
      %v693 = vrcp.pop %v692
      %v694 = vmul.f32 %v689, %v693
      %v695 = vpack.c.bf16 %v694, %v694
      %v697 = vcombine.high %v694, %v694
      %v699 = vunpack.c.l.s4 1966171168
      %v700 = vunpack.c.0.s8 %v699
      %v701 = vlaneseq
      %v702 = vshrl.u32 %v701, 7
      %v703 = vsub.s32 %v700, %v702
      %v704 = vrot.slane %v694, %v703
      %v706 = vunpack.c.l.s4 1966171168
      %v707 = vunpack.c.0.s8 %v706
      %v708 = vlaneseq
      %v709 = vshrl.u32 %v708, 7
      %v710 = vsub.s32 %v707, %v709
      %v711 = vrot.slane %v697, %v710
      %v712 = vcombine.high %v704, %v704
      %v713 = vcombine.high %v711, %v711
      %v715 = vunpack.c.l.s4 1966171168
      %v716 = vunpack.c.0.s8 %v715
      %v717 = vlaneseq
      %v718 = vshrl.u32 %v717, 7
      %v719 = vsub.s32 %v716, %v718
      %v720 = vrot.slane %v704, %v719
      %v722 = vunpack.c.l.s4 1966171168
      %v723 = vunpack.c.0.s8 %v722
      %v724 = vlaneseq
      %v725 = vshrl.u32 %v724, 7
      %v726 = vsub.s32 %v723, %v725
      %v727 = vrot.slane %v711, %v726
      %v729 = vunpack.c.l.s4 1966171168
      %v730 = vunpack.c.0.s8 %v729
      %v731 = vlaneseq
      %v732 = vshrl.u32 %v731, 7
      %v733 = vsub.s32 %v730, %v732
      %v734 = vrot.slane %v712, %v733
      %v736 = vunpack.c.l.s4 1966171168
      %v737 = vunpack.c.0.s8 %v736
      %v738 = vlaneseq
      %v739 = vshrl.u32 %v738, 7
      %v740 = vsub.s32 %v737, %v739
      %v741 = vrot.slane %v713, %v740
      %v742 = vcombine.high %v720, %v720
      %v743 = vcombine.high %v727, %v727
      %v744 = vcombine.high %v734, %v734
      %v745 = vcombine.high %v741, %v741
      %v746 = vld [vmem:[%s447] sm:$0xf]
      %v747 = vld [vmem:[%s447 + $0x4] sm:$0xf]
      %v748 = vld [vmem:[%s447 + $0x8] sm:$0xf]
      %v749 = vld [vmem:[%s447 + $0xc] sm:$0xf]
      %v750 = vld [vmem:[%s447 + $0x10] sm:$0xf]
      %v751 = vld [vmem:[%s447 + $0x14] sm:$0xf]
      %v752 = vld [vmem:[%s447 + $0x18] sm:$0xf]
      %v753 = vld [vmem:[%s447 + $0x1c] sm:$0xf]
      %v754 = vunpack.c.l.bf16 %v746
      %v755 = vunpack.c.l.bf16 %v747
      %v756 = vunpack.c.l.bf16 %v748
      %v757 = vunpack.c.l.bf16 %v749
      %v758 = vunpack.c.l.bf16 %v750
      %v759 = vunpack.c.l.bf16 %v751
      %v760 = vunpack.c.l.bf16 %v752
      %v761 = vunpack.c.l.bf16 %v753
      %v762 = vlaneseq
      %v763 = vshrl.u32 %v762, 7
      %v764 = vsub.s32 0, %v763
      %v765 = vrot.slane %v720, %v764
      %v766 = vlaneseq
      %v767 = vshrl.u32 %v766, 7
      %v768 = vsub.s32 0, %v767
      %v769 = vrot.slane %v734, %v768
      %v770 = vlaneseq
      %v771 = vshrl.u32 %v770, 7
      %v772 = vsub.s32 0, %v771
      %v773 = vrot.slane %v742, %v772
      %v774 = vlaneseq
      %v775 = vshrl.u32 %v774, 7
      %v776 = vsub.s32 0, %v775
      %v777 = vrot.slane %v744, %v776
      %v778 = vlaneseq
      %v779 = vshrl.u32 %v778, 7
      %v780 = vsub.s32 0, %v779
      %v781 = vrot.slane %v727, %v780
      %v782 = vlaneseq
      %v783 = vshrl.u32 %v782, 7
      %v784 = vsub.s32 0, %v783
      %v785 = vrot.slane %v741, %v784
      %v786 = vlaneseq
      %v787 = vshrl.u32 %v786, 7
      %v788 = vsub.s32 0, %v787
      %v789 = vrot.slane %v743, %v788
      %v790 = vlaneseq
      %v791 = vshrl.u32 %v790, 7
      %v792 = vsub.s32 0, %v791
      %v793 = vrot.slane %v745, %v792
      %v802 = vmul.f32 %v765, %v754
      %v803 = vmul.f32 %v769, %v755
      %v804 = vmul.f32 %v773, %v756
      %v805 = vmul.f32 %v777, %v757
      %v806 = vmul.f32 %v781, %v758
      %v807 = vmul.f32 %v785, %v759
      %v808 = vmul.f32 %v789, %v760
      %v809 = vmul.f32 %v793, %v761
      %v810 = vsel %vm550, %v802, 0.0
      %811 = vadd.xlane.f32.xlu0 %v810
      %v812 = vpop.xlane.xlu0 %811
      %v813 = vsel %vm550, %v803, 0.0
      %814 = vadd.xlane.f32.xlu0 %v813
      %v815 = vpop.xlane.xlu0 %814
      %v816 = vsel %vm550, %v804, 0.0
      %817 = vadd.xlane.f32.xlu0 %v816
      %v818 = vpop.xlane.xlu0 %817
      %v819 = vsel %vm550, %v805, 0.0
      %820 = vadd.xlane.f32.xlu0 %v819
      %v821 = vpop.xlane.xlu0 %820
      %v822 = vsel %vm550, %v806, 0.0
      %823 = vadd.xlane.f32.xlu0 %v822
      %v824 = vpop.xlane.xlu0 %823
      %v825 = vsel %vm550, %v807, 0.0
      %826 = vadd.xlane.f32.xlu0 %v825
      %v827 = vpop.xlane.xlu0 %826
      %v828 = vsel %vm550, %v808, 0.0
      %829 = vadd.xlane.f32.xlu0 %v828
      %v830 = vpop.xlane.xlu0 %829
      %v831 = vsel %vm550, %v809, 0.0
      %832 = vadd.xlane.f32.xlu0 %v831
      %v833 = vpop.xlane.xlu0 %832
      %v842 = vlaneseq
      %v843 = vand.u32 %v842, 127
      %v844 = vlaneseq
      %v845 = vshrl.u32 %v844, 7
      %v846 = vsub.s32 %v843, %v845
      %v847 = vrot.slane %v812, %v846
      %v848 = vlaneseq
      %v849 = vshrl.u32 %v848, 7
      %v850 = vsub.s32 %v843, %v849
      %v851 = vrot.slane %v815, %v850
      %v852 = vlaneseq
      %v853 = vshrl.u32 %v852, 7
      %v854 = vsub.s32 %v843, %v853
      %v855 = vrot.slane %v818, %v854
      %v856 = vlaneseq
      %v857 = vshrl.u32 %v856, 7
      %v858 = vsub.s32 %v843, %v857
      %v859 = vrot.slane %v821, %v858
      %v860 = vlaneseq
      %v861 = vshrl.u32 %v860, 7
      %v862 = vsub.s32 %v843, %v861
      %v863 = vrot.slane %v824, %v862
      %v864 = vlaneseq
      %v865 = vshrl.u32 %v864, 7
      %v866 = vsub.s32 %v843, %v865
      %v867 = vrot.slane %v827, %v866
      %v868 = vlaneseq
      %v869 = vshrl.u32 %v868, 7
      %v870 = vsub.s32 %v843, %v869
      %v871 = vrot.slane %v830, %v870
      %v872 = vlaneseq
      %v873 = vshrl.u32 %v872, 7
      %v874 = vsub.s32 %v843, %v873
      %v875 = vrot.slane %v833, %v874
      %v876 = vsel %vm615, %v851, %v847
      %v877 = vsel %vm617, %v855, %v876
      %v878 = vsel %vm619, %v859, %v877
      %v879 = vsel %vm621, %v863, %v878
      %v880 = vsel %vm623, %v867, %v879
      %v881 = vsel %vm625, %v871, %v880
      %v882 = vsel %vm627, %v875, %v881
      %v885 = vsel %vm550, %v695, 0
      %vm887 = vcmask 1043456
      %v889 = vsel %vm887, %v466, 0
      %891 = vmatprep.subr.bf16.mxu0 0
      %892 = vmatpush1.bf16.msra.mxu0 0
      %893 = vmatprep.subr.bf16.mxu0 0
      %894 = vmatpush1.bf16.msra.mxu0 0
      %895 = vmatprep.subr.bf16.mxu0 0
      %896 = vmatpush1.bf16.msra.mxu0 0
      %897 = vmatprep.subr.bf16.mxu0 0
      %898 = vmatpush1.bf16.msra.mxu0 0
      %899 = vmatprep.subr.bf16.mxu0 0
      %900 = vmatpush1.bf16.msra.mxu0 0
      %901 = vmatprep.subr.bf16.mxu0 0
      %902 = vmatpush1.bf16.msra.mxu0 0
      %903 = vmatprep.subr.bf16.mxu0 0
      %904 = vmatpush1.bf16.msra.mxu0 0
      %905 = vmatprep.subr.bf16.mxu0 0
      %906 = vmatpush1.bf16.msra.mxu0 %v889
      %907 = vmatprep.subr.bf16.mxu0 0
      %908 = vmatpush2.bf16.msra.mxu0 0
      %909 = vmatprep.subr.bf16.mxu0 0
      %910 = vmatpush2.bf16.msra.mxu0 0
      %911 = vmatprep.subr.bf16.mxu0 0
      %912 = vmatpush2.bf16.msra.mxu0 0
      %913 = vmatprep.subr.bf16.mxu0 0
      %914 = vmatpush2.bf16.msra.mxu0 0
      %915 = vmatprep.subr.bf16.mxu0 0
      %916 = vmatpush2.bf16.msra.mxu0 0
      %917 = vmatprep.subr.bf16.mxu0 0
      %918 = vmatpush2.bf16.msra.mxu0 0
      %919 = vmatprep.subr.bf16.mxu0 0
      %920 = vmatpush2.bf16.msra.mxu0 0
      %921 = vmatprep.subr.bf16.mxu0 0
      %922 = vmatpush2.bf16.msra.mxu0 0
      %923 = vmatprep.mubr.bf16.mxu0 0
      %924 = vmatmul.mubr.bf16.gmra.mxu0 %v885
      %v925 = vpop.f32.mrf.mxu0
      %v926 = vadd.f32 %v882, %v925
      %v927 = vpop.f32.mrf.mxu0
      %v928 = vpop.f32.mrf.mxu0
      %v929 = vpop.f32.mrf.mxu0
      %930 = vdwg.mxu0
      %v931 = vpack.c.bf16 %v926, %v926
      %vm932 = vcmask 60416
      %933 = vst.msk [vmem:[%s462] sm:$0xf] %vm932, %v931
      %p934 = scmp.lt.s32.totalorder %s22, 1
      %s935 = scalar_select %p934, %s22, 1
      %p936 = scmp.lt.s32.totalorder %s24, 3
      %s937 = scalar_select %p936, %s24, 3
      %p938 = scmp.lt.s32.totalorder %s23, 0
      %s939 = scalar_select %p938, %s23, 0
      %s940 = sadd.s32 %s939, %s937
      %s941 = smul.addr %s935, 4
      %s942 = sadd.s32 %s940, %s941
      %s943 = smul.addr %s942, 4
      %s944 = scalar_lea.vmem %s6, %s943
      // Predicated region
      $region45: #{encoder_forward.11} parent=43 // pred_check
        %p945 = pneg %p226
      $region46: #{encoder_forward.11} parent=43 // pred_check_branch
        %947 = sbr.rel (%p945) target = $region48
      $region47: #{encoder_forward.11} parent=43 // pred_region
        _
      $region48: #{encoder_forward.11} parent=43 // pred_fallthru
        _
    $region44: #{encoder_forward.11} parent=5 // pred_fallthru
      _
    %p948 = scmp.le.s32.totalorder 2, %s12
    // Predicated region
    $region49: #{encoder_forward.11} parent=5 // pred_check
      %p949 = pneg %p948
    $region50: #{encoder_forward.11} parent=5 // pred_check_branch
      %951 = sbr.rel (%p949) target = $region52
    $region51: #{encoder_forward.11} parent=5 // pred_region
      %s952 = ssub.s32 %s12, 2
      // Predicated region
      $region53: #{encoder_forward.11} parent=51 // pred_check
        %p953 = pneg %p232
      $region54: #{encoder_forward.11} parent=51 // pred_check_branch
        %955 = sbr.rel (%p953) target = $region56
      $region55: #{encoder_forward.11} parent=51 // pred_region
        %p956 = scmp.lt.s32.totalorder %s25, 1
        %s957 = scalar_select %p956, %s25, 1
        %p958 = scmp.lt.s32.totalorder %s27, 3
        %s959 = scalar_select %p958, %s27, 3
        %p960 = scmp.lt.s32.totalorder %s26, 0
        %s961 = scalar_select %p960, %s26, 0
        %s962 = sadd.s32 %s961, %s959
        %s963 = smul.addr %s957, 4
        %s964 = sadd.s32 %s962, %s963
        %s965 = smul.addr %s964, 4
        %s966 = scalar_lea.vmem %s6, %s965
      $region56: #{encoder_forward.11} parent=51 // pred_fallthru
        _
    $region52: #{encoder_forward.11} parent=5 // pred_fallthru
      _
  $region6: #{encoder_forward.11} parent=0 // loop_footer
    %s16 = sadd.s32 1, %s12
  $region7: #{encoder_forward.11} parent=0 // loop_footer_branch
    %11 = sbr.rel target = $region3
  $region8: #{encoder_forward.11} parent=0 // loop_exit
    _

// kernel: encoder_forward.14
$region0: #{encoder_forward.14}
  #allocation0 [shape = 'u32[]', space=smem, size = 0x4, offset = 0x4, fixed_abs, tag = 'smem constant byte address 0x4 - core index']
  #allocation1 [shape = 'u32[144,128]{1,0:T(1,128)}', space=vmem, size = 0x12000, scoped, tag = 'internal scratch']
  #allocation2 [shape = 'f32[16,32]{1,0:T(8,128)}', space=vmem, size = 0x2000, scoped, tag = 'scratch operand']
  %s0 = inlined_call_operand.vmem [shape: bf16[16,64], index: 0, kind: input, shape index: {}]
  %s1 = inlined_call_operand.vmem [shape: bf16[64,32], index: 1, kind: input, shape index: {}]
  %s2 = inlined_call_operand.vmem [shape: f32[1,32], index: 2, kind: input, shape index: {}]
  %s3 = inlined_call_operand.vmem [shape: f32[16,32], index: 3, kind: input, shape index: {}, may-alias: {3,4}]
  %s4 = inlined_call_operand.vmem [shape: f32[16,32], index: 4, kind: output, shape index: {}, may-alias: {3,4}]
  %s5 = sld [smem:[#allocation0]]
  $region34: #{encoder_forward.14} parent=0
    _
  %s7 = ssub.s32 1, %s5
  %s8 = scalar_select 0, %s7, %s5
  // Predicated region
  $region2: #{encoder_forward.14} parent=0 // pred_check
    _
  $region3: #{encoder_forward.14} parent=0 // pred_check_branch
    %10 = sbr.rel (0) target = $region5
  $region4: #{encoder_forward.14} parent=0 // pred_region
    _
  $region5: #{encoder_forward.14} parent=0 // pred_fallthru
    _
  // Predicated region
  $region6: #{encoder_forward.14} parent=0 // pred_check
    _
  $region7: #{encoder_forward.14} parent=0 // pred_check_branch
    %12 = sbr.rel (0) target = $region9
  $region8: #{encoder_forward.14} parent=0 // pred_region
    _
  $region9: #{encoder_forward.14} parent=0 // pred_fallthru
    _
  // Predicated region
  $region10: #{encoder_forward.14} parent=0 // pred_check
    _
  $region11: #{encoder_forward.14} parent=0 // pred_check_branch
    %14 = sbr.rel (0) target = $region13
  $region12: #{encoder_forward.14} parent=0 // pred_region
    _
  $region13: #{encoder_forward.14} parent=0 // pred_fallthru
    _
  // Predicated region
  $region14: #{encoder_forward.14} parent=0 // pred_check
    _
  $region15: #{encoder_forward.14} parent=0 // pred_check_branch
    %16 = sbr.rel (0) target = $region17
  $region16: #{encoder_forward.14} parent=0 // pred_region
    _
  $region17: #{encoder_forward.14} parent=0 // pred_fallthru
    _
  %p18 = scmp.eq.s32.totalorder 0, 0
  // Predicated region
  $region18: #{encoder_forward.14} parent=0 // pred_check
    %p19 = pneg %p18
  $region19: #{encoder_forward.14} parent=0 // pred_check_branch
    %21 = sbr.rel (%p19) target = $region21
  $region20: #{encoder_forward.14} parent=0 // pred_region
    %vm22 = vcmask 261120
    %23 = vst.msk [vmem:[#allocation2] sm:$0xff] %vm22, 0.0
    %24 = vst.msk [vmem:[#allocation2 + $0x8] sm:$0xff] %vm22, 0.0
  $region21: #{encoder_forward.14} parent=0 // pred_fallthru
    _
  %v25 = vld [vmem:[#allocation2] sm:$0xff]
  %v26 = vld [vmem:[#allocation2 + $0x8] sm:$0xff]
  %v27 = vld [vmem:[%s0] sm:$0xf]
  %v28 = vld [vmem:[%s0 + $0x4] sm:$0xf]
  %v29 = vld [vmem:[%s1] sm:$0xf]
  %v30 = vld [vmem:[%s1 + $0x4] sm:$0xf]
  %v31 = vld [vmem:[%s1 + $0x8] sm:$0xf]
  %v32 = vld [vmem:[%s1 + $0xc] sm:$0xf]
  %v33 = vld [vmem:[%s1 + $0x10] sm:$0xf]
  %v34 = vld [vmem:[%s1 + $0x14] sm:$0xf]
  %v35 = vld [vmem:[%s1 + $0x18] sm:$0xf]
  %v36 = vld [vmem:[%s1 + $0x1c] sm:$0xf]
  %v39 = vunpack.c.l.b16 %v27
  %v40 = vunpack.c.l.b16 %v28
  %v41 = vpack.c.b16 %v40, %v39
  %v50 = vunpack.c.l.b16 %v29
  %v51 = vunpack.c.l.b16 %v30
  %v52 = vunpack.c.l.b16 %v31
  %v53 = vunpack.c.l.b16 %v32
  %v54 = vunpack.c.l.b16 %v33
  %v55 = vunpack.c.l.b16 %v34
  %v56 = vunpack.c.l.b16 %v35
  %v57 = vunpack.c.l.b16 %v36
  %v58 = vpack.c.b16 %v51, %v50
  %v59 = vpack.c.b16 %v53, %v52
  %v60 = vpack.c.b16 %v55, %v54
  %v61 = vpack.c.b16 %v57, %v56
  %vm66 = vcmask 523264
  %v68 = vsel %vm66, %v41, 0
  %70 = vmatprep.subr.bf16.mxu0 0
  %71 = vmatpush1.bf16.msra.mxu0 0
  %72 = vmatprep.subr.bf16.mxu0 0
  %73 = vmatpush1.bf16.msra.mxu0 0
  %74 = vmatprep.subr.bf16.mxu0 0
  %75 = vmatpush1.bf16.msra.mxu0 0
  %76 = vmatprep.subr.bf16.mxu0 0
  %77 = vmatpush1.bf16.msra.mxu0 0
  %78 = vmatprep.subr.bf16.mxu0 0
  %79 = vmatpush1.bf16.msra.mxu0 %v61
  %80 = vmatprep.subr.bf16.mxu0 0
  %81 = vmatpush1.bf16.msra.mxu0 %v60
  %82 = vmatprep.subr.bf16.mxu0 0
  %83 = vmatpush1.bf16.msra.mxu0 %v59
  %84 = vmatprep.subr.bf16.mxu0 0
  %85 = vmatpush1.bf16.msra.mxu0 %v58
  %86 = vmatprep.subr.bf16.mxu0 0
  %87 = vmatpush2.bf16.msra.mxu0 0
  %88 = vmatprep.subr.bf16.mxu0 0
  %89 = vmatpush2.bf16.msra.mxu0 0
  %90 = vmatprep.subr.bf16.mxu0 0
  %91 = vmatpush2.bf16.msra.mxu0 0
  %92 = vmatprep.subr.bf16.mxu0 0
  %93 = vmatpush2.bf16.msra.mxu0 0
  %94 = vmatprep.subr.bf16.mxu0 0
  %95 = vmatpush2.bf16.msra.mxu0 0
  %96 = vmatprep.subr.bf16.mxu0 0
  %97 = vmatpush2.bf16.msra.mxu0 0
  %98 = vmatprep.subr.bf16.mxu0 0
  %99 = vmatpush2.bf16.msra.mxu0 0
  %100 = vmatprep.subr.bf16.mxu0 0
  %101 = vmatpush2.bf16.msra.mxu0 0
  %102 = vmatprep.mubr.bf16.mxu0 0
  %103 = vmatmul.mubr.bf16.gmra.mxu0 %v68
  %v104 = vpop.f32.mrf.mxu0
  %v105 = vadd.f32 0.0, %v104
  %v106 = vpop.f32.mrf.mxu0
  %v107 = vpop.f32.mrf.mxu0
  %v108 = vadd.f32 0.0, %v107
  %v109 = vpop.f32.mrf.mxu0
  %110 = vdwg.mxu0
  %v111 = vadd.f32 %v25, %v105
  %v112 = vadd.f32 %v26, %v108
  %vm113 = vcmask 261120
  %114 = vst.msk [vmem:[#allocation2] sm:$0xff] %vm113, %v111
  %115 = vst.msk [vmem:[#allocation2 + $0x8] sm:$0xff] %vm113, %v112
  // Predicated region
  $region22: #{encoder_forward.14} parent=0 // pred_check
    %p116 = pneg %p18
  $region23: #{encoder_forward.14} parent=0 // pred_check_branch
    %118 = sbr.rel (%p116) target = $region25
  $region24: #{encoder_forward.14} parent=0 // pred_region
    %v119 = vld [vmem:[#allocation2] sm:$0xff]
    %v120 = vld [vmem:[#allocation2 + $0x8] sm:$0xff]
    %v121 = vld [vmem:[%s2] sm:$0x1]
    %v123 = vlaneseq
    %v124 = vshrl.u32 %v123, 7
    %v125 = vsub.s32 0, %v124
    %v126 = vrot.slane %v121, %v125
    %v128 = vadd.f32 %v119, %v126
    %v129 = vadd.f32 %v120, %v126
    %v130 = vld [vmem:[%s3] sm:$0xff]
    %v131 = vld [vmem:[%s3 + $0x8] sm:$0xff]
    %v132 = vadd.f32 %v128, %v130
    %v133 = vadd.f32 %v129, %v131
    %134 = vst.msk [vmem:[%s4] sm:$0xff] %vm113, %v132
    %135 = vst.msk [vmem:[%s4 + $0x8] sm:$0xff] %vm113, %v133
  $region25: #{encoder_forward.14} parent=0 // pred_fallthru
    _
  // Predicated region
  $region26: #{encoder_forward.14} parent=0 // pred_check
    _
  $region27: #{encoder_forward.14} parent=0 // pred_check_branch
    %137 = sbr.rel (0) target = $region29
  $region28: #{encoder_forward.14} parent=0 // pred_region
    _
  $region29: #{encoder_forward.14} parent=0 // pred_fallthru
    _
  // Predicated region
  $region30: #{encoder_forward.14} parent=0 // pred_check
    _
  $region31: #{encoder_forward.14} parent=0 // pred_check_branch
    %139 = sbr.rel (0) target = $region33
  $region32: #{encoder_forward.14} parent=0 // pred_region
    _
  $region33: #{encoder_forward.14} parent=0 // pred_fallthru
    _

// kernel: encoder_forward.13
$region0: #{encoder_forward.13}
  #allocation0 [shape = 'u32[]', space=smem, size = 0x4, offset = 0x4, fixed_abs, tag = 'smem constant byte address 0x4 - core index']
  #allocation1 [shape = 'u32[144,128]{1,0:T(1,128)}', space=vmem, size = 0x12000, scoped, tag = 'internal scratch']
  #allocation2 [shape = 'bf16[16,32]{1,0:T(8,128)(2,1)}', space=vmem, size = 0x1000, scoped, tag = 'scratch operand']
  %s0 = inlined_call_operand.vmem [shape: f32[16,32], index: 0, kind: input, shape index: {}]
  %s1 = inlined_call_operand.vmem [shape: f32[1,32], index: 1, kind: input, shape index: {}]
  %s2 = inlined_call_operand.vmem [shape: f32[1,32], index: 2, kind: input, shape index: {}]
  %s3 = inlined_call_operand.vmem [shape: bf16[32,64], index: 3, kind: input, shape index: {}]
  %s4 = inlined_call_operand.vmem [shape: f32[1,64], index: 4, kind: input, shape index: {}]
  %s5 = inlined_call_operand.vmem [shape: bf16[16,64], index: 5, kind: output, shape index: {}]
  %s6 = sld [smem:[#allocation0]]
  $region34: #{encoder_forward.13} parent=0
    _
  %s8 = ssub.s32 1, %s6
  %s9 = scalar_select 0, %s8, %s6
  // Predicated region
  $region2: #{encoder_forward.13} parent=0 // pred_check
    _
  $region3: #{encoder_forward.13} parent=0 // pred_check_branch
    %11 = sbr.rel (0) target = $region5
  $region4: #{encoder_forward.13} parent=0 // pred_region
    _
  $region5: #{encoder_forward.13} parent=0 // pred_fallthru
    _
  // Predicated region
  $region6: #{encoder_forward.13} parent=0 // pred_check
    _
  $region7: #{encoder_forward.13} parent=0 // pred_check_branch
    %13 = sbr.rel (0) target = $region9
  $region8: #{encoder_forward.13} parent=0 // pred_region
    _
  $region9: #{encoder_forward.13} parent=0 // pred_fallthru
    _
  // Predicated region
  $region10: #{encoder_forward.13} parent=0 // pred_check
    _
  $region11: #{encoder_forward.13} parent=0 // pred_check_branch
    %15 = sbr.rel (0) target = $region13
  $region12: #{encoder_forward.13} parent=0 // pred_region
    _
  $region13: #{encoder_forward.13} parent=0 // pred_fallthru
    _
  // Predicated region
  $region14: #{encoder_forward.13} parent=0 // pred_check
    _
  $region15: #{encoder_forward.13} parent=0 // pred_check_branch
    %17 = sbr.rel (0) target = $region17
  $region16: #{encoder_forward.13} parent=0 // pred_region
    _
  $region17: #{encoder_forward.13} parent=0 // pred_fallthru
    _
  // Predicated region
  $region18: #{encoder_forward.13} parent=0 // pred_check
    _
  $region19: #{encoder_forward.13} parent=0 // pred_check_branch
    %19 = sbr.rel (0) target = $region21
  $region20: #{encoder_forward.13} parent=0 // pred_region
    _
  $region21: #{encoder_forward.13} parent=0 // pred_fallthru
    _
  %p21 = scmp.eq.s32.totalorder 0, 0
  // Predicated region
  $region22: #{encoder_forward.13} parent=0 // pred_check
    %p22 = pneg %p21
  $region23: #{encoder_forward.13} parent=0 // pred_check_branch
    %24 = sbr.rel (%p22) target = $region25
  $region24: #{encoder_forward.13} parent=0 // pred_region
    %v25 = vld [vmem:[%s0] sm:$0xff]
    %v26 = vld [vmem:[%s0 + $0x8] sm:$0xff]
    %vm27 = vcmask 261120
    %v28 = vsel %vm27, %v25, 0.0
    %29 = vadd.xlane.f32.xlu0 %v28
    %v30 = vpop.xlane.xlu0 %29
    %v31 = vsel %vm27, %v26, 0.0
    %32 = vadd.xlane.f32.xlu0 %v31
    %v33 = vpop.xlane.xlu0 %32
    %v34 = vrcp.pop 32.0
    %v35 = vmul.f32 %v30, %v34
    %v36 = vmul.f32 %v33, %v34
    %v37 = vsub.f32 %v25, %v35
    %v38 = vsub.f32 %v26, %v36
    %v39 = vmul.f32 %v37, %v37
    %v40 = vmul.f32 %v38, %v38
    %v41 = vsel %vm27, %v39, 0.0
    %42 = vadd.xlane.f32.xlu0 %v41
    %v43 = vpop.xlane.xlu0 %42
    %v44 = vsel %vm27, %v40, 0.0
    %45 = vadd.xlane.f32.xlu0 %v44
    %v46 = vpop.xlane.xlu0 %45
    %v47 = vmul.f32 %v43, %v34
    %v48 = vmul.f32 %v46, %v34
    %v49 = vadd.f32 %v47, 1e-05
    %v50 = vadd.f32 %v48, 1e-05
    %v51 = vrsqrt.pop %v49
    %v52 = vrsqrt.pop %v50
    %v53 = vmul.f32 %v37, %v51
    %v54 = vmul.f32 %v38, %v52
    %v55 = vld [vmem:[%s1] sm:$0x1]
    %v57 = vlaneseq
    %v58 = vshrl.u32 %v57, 7
    %v59 = vsub.s32 0, %v58
    %v60 = vrot.slane %v55, %v59
    %v62 = vmul.f32 %v53, %v60
    %v63 = vmul.f32 %v54, %v60
    %v64 = vld [vmem:[%s2] sm:$0x1]
    %v66 = vlaneseq
    %v67 = vshrl.u32 %v66, 7
    %v68 = vsub.s32 0, %v67
    %v69 = vrot.slane %v64, %v68
    %v71 = vadd.f32 %v62, %v69
    %v72 = vadd.f32 %v63, %v69
    %v73 = vpack.c.bf16 %v72, %v71
    %v75 = vunpack.c.l.b16 %v73
    %v76 = vunpack.c.h.b16 %v73
    %v77 = vpack.c.b16 %v75, %v75
    %v78 = vpack.c.b16 %v76, %v76
    %vm81 = vcmask 257024
    %82 = vst.msk [vmem:[#allocation2] sm:$0xf] %vm81, %v77
    %83 = vst.msk [vmem:[#allocation2 + $0x4] sm:$0xf] %vm81, %v78
  $region25: #{encoder_forward.13} parent=0 // pred_fallthru
    _
  %v84 = vld [vmem:[#allocation2] sm:$0xf]
  %v85 = vld [vmem:[#allocation2 + $0x4] sm:$0xf]
  %v86 = vld [vmem:[%s3] sm:$0xf]
  %v87 = vld [vmem:[%s3 + $0x4] sm:$0xf]
  %v88 = vld [vmem:[%s3 + $0x8] sm:$0xf]
  %v89 = vld [vmem:[%s3 + $0xc] sm:$0xf]
  %v90 = vld [vmem:[%s4] sm:$0x1]
  %v92 = vlaneseq
  %v93 = vshrl.u32 %v92, 7
  %v94 = vsub.s32 0, %v93
  %v95 = vrot.slane %v90, %v94
  %v99 = vunpack.c.l.b16 %v84
  %v100 = vunpack.c.l.b16 %v85
  %v101 = vpack.c.b16 %v100, %v99
  %v106 = vunpack.c.l.b16 %v86
  %v107 = vunpack.c.l.b16 %v87
  %v108 = vunpack.c.l.b16 %v88
  %v109 = vunpack.c.l.b16 %v89
  %v110 = vpack.c.b16 %v107, %v106
  %v111 = vpack.c.b16 %v109, %v108
  %vm114 = vcmask 261120
  %v116 = vsel %vm114, %v101, 0
  %118 = vmatprep.subr.bf16.mxu0 0
  %119 = vmatpush1.bf16.msra.mxu0 0
  %120 = vmatprep.subr.bf16.mxu0 0
  %121 = vmatpush1.bf16.msra.mxu0 0
  %122 = vmatprep.subr.bf16.mxu0 0
  %123 = vmatpush1.bf16.msra.mxu0 0
  %124 = vmatprep.subr.bf16.mxu0 0
  %125 = vmatpush1.bf16.msra.mxu0 0
  %126 = vmatprep.subr.bf16.mxu0 0
  %127 = vmatpush1.bf16.msra.mxu0 0
  %128 = vmatprep.subr.bf16.mxu0 0
  %129 = vmatpush1.bf16.msra.mxu0 0
  %130 = vmatprep.subr.bf16.mxu0 0
  %131 = vmatpush1.bf16.msra.mxu0 %v111
  %132 = vmatprep.subr.bf16.mxu0 0
  %133 = vmatpush1.bf16.msra.mxu0 %v110
  %134 = vmatprep.subr.bf16.mxu0 0
  %135 = vmatpush2.bf16.msra.mxu0 0
  %136 = vmatprep.subr.bf16.mxu0 0
  %137 = vmatpush2.bf16.msra.mxu0 0
  %138 = vmatprep.subr.bf16.mxu0 0
  %139 = vmatpush2.bf16.msra.mxu0 0
  %140 = vmatprep.subr.bf16.mxu0 0
  %141 = vmatpush2.bf16.msra.mxu0 0
  %142 = vmatprep.subr.bf16.mxu0 0
  %143 = vmatpush2.bf16.msra.mxu0 0
  %144 = vmatprep.subr.bf16.mxu0 0
  %145 = vmatpush2.bf16.msra.mxu0 0
  %146 = vmatprep.subr.bf16.mxu0 0
  %147 = vmatpush2.bf16.msra.mxu0 0
  %148 = vmatprep.subr.bf16.mxu0 0
  %149 = vmatpush2.bf16.msra.mxu0 0
  %150 = vmatprep.mubr.bf16.mxu0 0
  %151 = vmatmul.mubr.bf16.gmra.mxu0 %v116
  %v152 = vpop.f32.mrf.mxu0
  %v153 = vadd.f32 %v95, %v152
  %v154 = vpop.f32.mrf.mxu0
  %v155 = vpop.f32.mrf.mxu0
  %v156 = vadd.f32 %v95, %v155
  %v157 = vpop.f32.mrf.mxu0
  %158 = vdwg.mxu0
  %v159 = vmax.f32 %v153, 0.0
  %v160 = vmax.f32 %v156, 0.0
  %v161 = vpack.c.bf16 %v160, %v159
  %v163 = vunpack.c.l.b16 %v161
  %v164 = vunpack.c.h.b16 %v161
  %v165 = vpack.c.b16 %v163, %v163
  %v166 = vpack.c.b16 %v164, %v164
  %vm169 = vcmask 519168
  %170 = vst.msk [vmem:[%s5] sm:$0xf] %vm169, %v165
  %171 = vst.msk [vmem:[%s5 + $0x4] sm:$0xf] %vm169, %v166
  // Predicated region
  $region26: #{encoder_forward.13} parent=0 // pred_check
    _
  $region27: #{encoder_forward.13} parent=0 // pred_check_branch
    %173 = sbr.rel (0) target = $region29
  $region28: #{encoder_forward.13} parent=0 // pred_region
    _
  $region29: #{encoder_forward.13} parent=0 // pred_fallthru
    _
  // Predicated region
  $region30: #{encoder_forward.13} parent=0 // pred_check
    _
  $region31: #{encoder_forward.13} parent=0 // pred_check_branch
    %175 = sbr.rel (0) target = $region33
  $region32: #{encoder_forward.13} parent=0 // pred_region
    _
  $region33: #{encoder_forward.13} parent=0 // pred_fallthru
    _

// kernel: encoder_forward.12
$region0: #{encoder_forward.12}
  #allocation0 [shape = 'u32[]', space=smem, size = 0x4, offset = 0x4, fixed_abs, tag = 'smem constant byte address 0x4 - core index']
  #allocation1 [shape = 'u32[144,128]{1,0:T(1,128)}', space=vmem, size = 0x12000, scoped, tag = 'internal scratch']
  #allocation2 [shape = 'f32[16,32]{1,0:T(8,128)}', space=vmem, size = 0x2000, scoped, tag = 'scratch operand']
  %s0 = inlined_call_operand.vmem [shape: bf16[16,32], index: 0, kind: input, shape index: {}]
  %s1 = inlined_call_operand.vmem [shape: bf16[32,32], index: 1, kind: input, shape index: {}]
  %s2 = inlined_call_operand.vmem [shape: f32[1,32], index: 2, kind: input, shape index: {}]
  %s3 = inlined_call_operand.vmem [shape: f32[16,32], index: 3, kind: input, shape index: {}, may-alias: {3,4}]
  %s4 = inlined_call_operand.vmem [shape: f32[16,32], index: 4, kind: output, shape index: {}, may-alias: {3,4}]
  %s5 = sld [smem:[#allocation0]]
  $region34: #{encoder_forward.12} parent=0
    _
  %s7 = ssub.s32 1, %s5
  %s8 = scalar_select 0, %s7, %s5
  // Predicated region
  $region2: #{encoder_forward.12} parent=0 // pred_check
    _
  $region3: #{encoder_forward.12} parent=0 // pred_check_branch
    %10 = sbr.rel (0) target = $region5
  $region4: #{encoder_forward.12} parent=0 // pred_region
    _
  $region5: #{encoder_forward.12} parent=0 // pred_fallthru
    _
  // Predicated region
  $region6: #{encoder_forward.12} parent=0 // pred_check
    _
  $region7: #{encoder_forward.12} parent=0 // pred_check_branch
    %12 = sbr.rel (0) target = $region9
  $region8: #{encoder_forward.12} parent=0 // pred_region
    _
  $region9: #{encoder_forward.12} parent=0 // pred_fallthru
    _
  // Predicated region
  $region10: #{encoder_forward.12} parent=0 // pred_check
    _
  $region11: #{encoder_forward.12} parent=0 // pred_check_branch
    %14 = sbr.rel (0) target = $region13
  $region12: #{encoder_forward.12} parent=0 // pred_region
    _
  $region13: #{encoder_forward.12} parent=0 // pred_fallthru
    _
  // Predicated region
  $region14: #{encoder_forward.12} parent=0 // pred_check
    _
  $region15: #{encoder_forward.12} parent=0 // pred_check_branch
    %16 = sbr.rel (0) target = $region17
  $region16: #{encoder_forward.12} parent=0 // pred_region
    _
  $region17: #{encoder_forward.12} parent=0 // pred_fallthru
    _
  %p18 = scmp.eq.s32.totalorder 0, 0
  // Predicated region
  $region18: #{encoder_forward.12} parent=0 // pred_check
    %p19 = pneg %p18
  $region19: #{encoder_forward.12} parent=0 // pred_check_branch
    %21 = sbr.rel (%p19) target = $region21
  $region20: #{encoder_forward.12} parent=0 // pred_region
    %vm22 = vcmask 261120
    %23 = vst.msk [vmem:[#allocation2] sm:$0xff] %vm22, 0.0
    %24 = vst.msk [vmem:[#allocation2 + $0x8] sm:$0xff] %vm22, 0.0
  $region21: #{encoder_forward.12} parent=0 // pred_fallthru
    _
  %v25 = vld [vmem:[#allocation2] sm:$0xff]
  %v26 = vld [vmem:[#allocation2 + $0x8] sm:$0xff]
  %v27 = vld [vmem:[%s0] sm:$0xf]
  %v28 = vld [vmem:[%s0 + $0x4] sm:$0xf]
  %v29 = vld [vmem:[%s1] sm:$0xf]
  %v30 = vld [vmem:[%s1 + $0x4] sm:$0xf]
  %v31 = vld [vmem:[%s1 + $0x8] sm:$0xf]
  %v32 = vld [vmem:[%s1 + $0xc] sm:$0xf]
  %v35 = vunpack.c.l.b16 %v27
  %v36 = vunpack.c.l.b16 %v28
  %v37 = vpack.c.b16 %v36, %v35
  %v42 = vunpack.c.l.b16 %v29
  %v43 = vunpack.c.l.b16 %v30
  %v44 = vunpack.c.l.b16 %v31
  %v45 = vunpack.c.l.b16 %v32
  %v46 = vpack.c.b16 %v43, %v42
  %v47 = vpack.c.b16 %v45, %v44
  %vm50 = vcmask 261120
  %v52 = vsel %vm50, %v37, 0
  %54 = vmatprep.subr.bf16.mxu0 0
  %55 = vmatpush1.bf16.msra.mxu0 0
  %56 = vmatprep.subr.bf16.mxu0 0
  %57 = vmatpush1.bf16.msra.mxu0 0
  %58 = vmatprep.subr.bf16.mxu0 0
  %59 = vmatpush1.bf16.msra.mxu0 0
  %60 = vmatprep.subr.bf16.mxu0 0
  %61 = vmatpush1.bf16.msra.mxu0 0
  %62 = vmatprep.subr.bf16.mxu0 0
  %63 = vmatpush1.bf16.msra.mxu0 0
  %64 = vmatprep.subr.bf16.mxu0 0
  %65 = vmatpush1.bf16.msra.mxu0 0
  %66 = vmatprep.subr.bf16.mxu0 0
  %67 = vmatpush1.bf16.msra.mxu0 %v47
  %68 = vmatprep.subr.bf16.mxu0 0
  %69 = vmatpush1.bf16.msra.mxu0 %v46
  %70 = vmatprep.subr.bf16.mxu0 0
  %71 = vmatpush2.bf16.msra.mxu0 0
  %72 = vmatprep.subr.bf16.mxu0 0
  %73 = vmatpush2.bf16.msra.mxu0 0
  %74 = vmatprep.subr.bf16.mxu0 0
  %75 = vmatpush2.bf16.msra.mxu0 0
  %76 = vmatprep.subr.bf16.mxu0 0
  %77 = vmatpush2.bf16.msra.mxu0 0
  %78 = vmatprep.subr.bf16.mxu0 0
  %79 = vmatpush2.bf16.msra.mxu0 0
  %80 = vmatprep.subr.bf16.mxu0 0
  %81 = vmatpush2.bf16.msra.mxu0 0
  %82 = vmatprep.subr.bf16.mxu0 0
  %83 = vmatpush2.bf16.msra.mxu0 0
  %84 = vmatprep.subr.bf16.mxu0 0
  %85 = vmatpush2.bf16.msra.mxu0 0
  %86 = vmatprep.mubr.bf16.mxu0 0
  %87 = vmatmul.mubr.bf16.gmra.mxu0 %v52
  %v88 = vpop.f32.mrf.mxu0
  %v89 = vadd.f32 0.0, %v88
  %v90 = vpop.f32.mrf.mxu0
  %v91 = vpop.f32.mrf.mxu0
  %v92 = vadd.f32 0.0, %v91
  %v93 = vpop.f32.mrf.mxu0
  %94 = vdwg.mxu0
  %v95 = vadd.f32 %v25, %v89
  %v96 = vadd.f32 %v26, %v92
  %97 = vst.msk [vmem:[#allocation2] sm:$0xff] %vm50, %v95
  %98 = vst.msk [vmem:[#allocation2 + $0x8] sm:$0xff] %vm50, %v96
  // Predicated region
  $region22: #{encoder_forward.12} parent=0 // pred_check
    %p99 = pneg %p18
  $region23: #{encoder_forward.12} parent=0 // pred_check_branch
    %101 = sbr.rel (%p99) target = $region25
  $region24: #{encoder_forward.12} parent=0 // pred_region
    %v102 = vld [vmem:[#allocation2] sm:$0xff]
    %v103 = vld [vmem:[#allocation2 + $0x8] sm:$0xff]
    %v104 = vld [vmem:[%s2] sm:$0x1]
    %v106 = vlaneseq
    %v107 = vshrl.u32 %v106, 7
    %v108 = vsub.s32 0, %v107
    %v109 = vrot.slane %v104, %v108
    %v111 = vadd.f32 %v102, %v109
    %v112 = vadd.f32 %v103, %v109
    %v113 = vld [vmem:[%s3] sm:$0xff]
    %v114 = vld [vmem:[%s3 + $0x8] sm:$0xff]
    %v115 = vadd.f32 %v111, %v113
    %v116 = vadd.f32 %v112, %v114
    %117 = vst.msk [vmem:[%s4] sm:$0xff] %vm50, %v115
    %118 = vst.msk [vmem:[%s4 + $0x8] sm:$0xff] %vm50, %v116
  $region25: #{encoder_forward.12} parent=0 // pred_fallthru
    _
  // Predicated region
  $region26: #{encoder_forward.12} parent=0 // pred_check
    _
  $region27: #{encoder_forward.12} parent=0 // pred_check_branch
    %120 = sbr.rel (0) target = $region29
  $region28: #{encoder_forward.12} parent=0 // pred_region
    _
  $region29: #{encoder_forward.12} parent=0 // pred_fallthru
    _
  // Predicated region
  $region30: #{encoder_forward.12} parent=0 // pred_check
    _
  $region31: #{encoder_forward.12} parent=0 // pred_check_branch
    %122 = sbr.rel (0) target = $region33
  $region32: #{encoder_forward.12} parent=0 // pred_region
    _
  $region33: #{encoder_forward.12} parent=0 // pred_fallthru
    _

// kernel: encoder_forward.19
$region0: #{encoder_forward.19}
  #allocation0 [shape = 'u32[]', space=smem, size = 0x4, offset = 0x4, fixed_abs, tag = 'smem constant byte address 0x4 - core index']
  #allocation1 [shape = 'u32[144,128]{1,0:T(1,128)}', space=vmem, size = 0x12000, scoped, tag = 'internal scratch']
  #allocation2 [shape = 'f32[16,32]{1,0:T(8,128)}', space=vmem, size = 0x2000, scoped, tag = 'scratch operand']
  %s0 = inlined_call_operand.vmem [shape: bf16[16,64], index: 0, kind: input, shape index: {}]
  %s1 = inlined_call_operand.vmem [shape: bf16[64,32], index: 1, kind: input, shape index: {}]
  %s2 = inlined_call_operand.vmem [shape: f32[1,32], index: 2, kind: input, shape index: {}]
  %s3 = inlined_call_operand.vmem [shape: f32[16,32], index: 3, kind: input, shape index: {}, may-alias: {3,6}]
  %s4 = inlined_call_operand.vmem [shape: f32[1,32], index: 4, kind: input, shape index: {}]
  %s5 = inlined_call_operand.vmem [shape: f32[1,32], index: 5, kind: input, shape index: {}]
  %s6 = inlined_call_operand.vmem [shape: f32[16,32], index: 6, kind: output, shape index: {}, may-alias: {3,6}]
  %s7 = sld [smem:[#allocation0]]
  $region42: #{encoder_forward.19} parent=0
    _
  %s9 = ssub.s32 1, %s7
  %s10 = scalar_select 0, %s9, %s7
  // Predicated region
  $region2: #{encoder_forward.19} parent=0 // pred_check
    _
  $region3: #{encoder_forward.19} parent=0 // pred_check_branch
    %12 = sbr.rel (0) target = $region5
  $region4: #{encoder_forward.19} parent=0 // pred_region
    _
  $region5: #{encoder_forward.19} parent=0 // pred_fallthru
    _
  // Predicated region
  $region6: #{encoder_forward.19} parent=0 // pred_check
    _
  $region7: #{encoder_forward.19} parent=0 // pred_check_branch
    %14 = sbr.rel (0) target = $region9
  $region8: #{encoder_forward.19} parent=0 // pred_region
    _
  $region9: #{encoder_forward.19} parent=0 // pred_fallthru
    _
  // Predicated region
  $region10: #{encoder_forward.19} parent=0 // pred_check
    _
  $region11: #{encoder_forward.19} parent=0 // pred_check_branch
    %16 = sbr.rel (0) target = $region13
  $region12: #{encoder_forward.19} parent=0 // pred_region
    _
  $region13: #{encoder_forward.19} parent=0 // pred_fallthru
    _
  // Predicated region
  $region14: #{encoder_forward.19} parent=0 // pred_check
    _
  $region15: #{encoder_forward.19} parent=0 // pred_check_branch
    %18 = sbr.rel (0) target = $region17
  $region16: #{encoder_forward.19} parent=0 // pred_region
    _
  $region17: #{encoder_forward.19} parent=0 // pred_fallthru
    _
  // Predicated region
  $region18: #{encoder_forward.19} parent=0 // pred_check
    _
  $region19: #{encoder_forward.19} parent=0 // pred_check_branch
    %20 = sbr.rel (0) target = $region21
  $region20: #{encoder_forward.19} parent=0 // pred_region
    _
  $region21: #{encoder_forward.19} parent=0 // pred_fallthru
    _
  // Predicated region
  $region22: #{encoder_forward.19} parent=0 // pred_check
    _
  $region23: #{encoder_forward.19} parent=0 // pred_check_branch
    %22 = sbr.rel (0) target = $region25
  $region24: #{encoder_forward.19} parent=0 // pred_region
    _
  $region25: #{encoder_forward.19} parent=0 // pred_fallthru
    _
  %p24 = scmp.eq.s32.totalorder 0, 0
  // Predicated region
  $region26: #{encoder_forward.19} parent=0 // pred_check
    %p25 = pneg %p24
  $region27: #{encoder_forward.19} parent=0 // pred_check_branch
    %27 = sbr.rel (%p25) target = $region29
  $region28: #{encoder_forward.19} parent=0 // pred_region
    %vm28 = vcmask 261120
    %29 = vst.msk [vmem:[#allocation2] sm:$0xff] %vm28, 0.0
    %30 = vst.msk [vmem:[#allocation2 + $0x8] sm:$0xff] %vm28, 0.0
  $region29: #{encoder_forward.19} parent=0 // pred_fallthru
    _
  %v31 = vld [vmem:[#allocation2] sm:$0xff]
  %v32 = vld [vmem:[#allocation2 + $0x8] sm:$0xff]
  %v33 = vld [vmem:[%s0] sm:$0xf]
  %v34 = vld [vmem:[%s0 + $0x4] sm:$0xf]
  %v35 = vld [vmem:[%s1] sm:$0xf]
  %v36 = vld [vmem:[%s1 + $0x4] sm:$0xf]
  %v37 = vld [vmem:[%s1 + $0x8] sm:$0xf]
  %v38 = vld [vmem:[%s1 + $0xc] sm:$0xf]
  %v39 = vld [vmem:[%s1 + $0x10] sm:$0xf]
  %v40 = vld [vmem:[%s1 + $0x14] sm:$0xf]
  %v41 = vld [vmem:[%s1 + $0x18] sm:$0xf]
  %v42 = vld [vmem:[%s1 + $0x1c] sm:$0xf]
  %v45 = vunpack.c.l.b16 %v33
  %v46 = vunpack.c.l.b16 %v34
  %v47 = vpack.c.b16 %v46, %v45
  %v56 = vunpack.c.l.b16 %v35
  %v57 = vunpack.c.l.b16 %v36
  %v58 = vunpack.c.l.b16 %v37
  %v59 = vunpack.c.l.b16 %v38
  %v60 = vunpack.c.l.b16 %v39
  %v61 = vunpack.c.l.b16 %v40
  %v62 = vunpack.c.l.b16 %v41
  %v63 = vunpack.c.l.b16 %v42
  %v64 = vpack.c.b16 %v57, %v56
  %v65 = vpack.c.b16 %v59, %v58
  %v66 = vpack.c.b16 %v61, %v60
  %v67 = vpack.c.b16 %v63, %v62
  %vm72 = vcmask 523264
  %v74 = vsel %vm72, %v47, 0
  %76 = vmatprep.subr.bf16.mxu0 0
  %77 = vmatpush1.bf16.msra.mxu0 0
  %78 = vmatprep.subr.bf16.mxu0 0
  %79 = vmatpush1.bf16.msra.mxu0 0
  %80 = vmatprep.subr.bf16.mxu0 0
  %81 = vmatpush1.bf16.msra.mxu0 0
  %82 = vmatprep.subr.bf16.mxu0 0
  %83 = vmatpush1.bf16.msra.mxu0 0
  %84 = vmatprep.subr.bf16.mxu0 0
  %85 = vmatpush1.bf16.msra.mxu0 %v67
  %86 = vmatprep.subr.bf16.mxu0 0
  %87 = vmatpush1.bf16.msra.mxu0 %v66
  %88 = vmatprep.subr.bf16.mxu0 0
  %89 = vmatpush1.bf16.msra.mxu0 %v65
  %90 = vmatprep.subr.bf16.mxu0 0
  %91 = vmatpush1.bf16.msra.mxu0 %v64
  %92 = vmatprep.subr.bf16.mxu0 0
  %93 = vmatpush2.bf16.msra.mxu0 0
  %94 = vmatprep.subr.bf16.mxu0 0
  %95 = vmatpush2.bf16.msra.mxu0 0
  %96 = vmatprep.subr.bf16.mxu0 0
  %97 = vmatpush2.bf16.msra.mxu0 0
  %98 = vmatprep.subr.bf16.mxu0 0
  %99 = vmatpush2.bf16.msra.mxu0 0
  %100 = vmatprep.subr.bf16.mxu0 0
  %101 = vmatpush2.bf16.msra.mxu0 0
  %102 = vmatprep.subr.bf16.mxu0 0
  %103 = vmatpush2.bf16.msra.mxu0 0
  %104 = vmatprep.subr.bf16.mxu0 0
  %105 = vmatpush2.bf16.msra.mxu0 0
  %106 = vmatprep.subr.bf16.mxu0 0
  %107 = vmatpush2.bf16.msra.mxu0 0
  %108 = vmatprep.mubr.bf16.mxu0 0
  %109 = vmatmul.mubr.bf16.gmra.mxu0 %v74
  %v110 = vpop.f32.mrf.mxu0
  %v111 = vadd.f32 0.0, %v110
  %v112 = vpop.f32.mrf.mxu0
  %v113 = vpop.f32.mrf.mxu0
  %v114 = vadd.f32 0.0, %v113
  %v115 = vpop.f32.mrf.mxu0
  %116 = vdwg.mxu0
  %v117 = vadd.f32 %v31, %v111
  %v118 = vadd.f32 %v32, %v114
  %vm119 = vcmask 261120
  %120 = vst.msk [vmem:[#allocation2] sm:$0xff] %vm119, %v117
  %121 = vst.msk [vmem:[#allocation2 + $0x8] sm:$0xff] %vm119, %v118
  // Predicated region
  $region30: #{encoder_forward.19} parent=0 // pred_check
    %p122 = pneg %p24
  $region31: #{encoder_forward.19} parent=0 // pred_check_branch
    %124 = sbr.rel (%p122) target = $region33
  $region32: #{encoder_forward.19} parent=0 // pred_region
    %v125 = vld [vmem:[#allocation2] sm:$0xff]
    %v126 = vld [vmem:[#allocation2 + $0x8] sm:$0xff]
    %v127 = vld [vmem:[%s2] sm:$0x1]
    %v129 = vlaneseq
    %v130 = vshrl.u32 %v129, 7
    %v131 = vsub.s32 0, %v130
    %v132 = vrot.slane %v127, %v131
    %v134 = vadd.f32 %v125, %v132
    %v135 = vadd.f32 %v126, %v132
    %v136 = vld [vmem:[%s3] sm:$0xff]
    %v137 = vld [vmem:[%s3 + $0x8] sm:$0xff]
    %v138 = vadd.f32 %v134, %v136
    %v139 = vadd.f32 %v135, %v137
    %v140 = vsel %vm119, %v138, 0.0
    %141 = vadd.xlane.f32.xlu0 %v140
    %v142 = vpop.xlane.xlu0 %141
    %v143 = vsel %vm119, %v139, 0.0
    %144 = vadd.xlane.f32.xlu0 %v143
    %v145 = vpop.xlane.xlu0 %144
    %v146 = vrcp.pop 32.0
    %v147 = vmul.f32 %v142, %v146
    %v148 = vmul.f32 %v145, %v146
    %v149 = vsub.f32 %v138, %v147
    %v150 = vsub.f32 %v139, %v148
    %v151 = vmul.f32 %v149, %v149
    %v152 = vmul.f32 %v150, %v150
    %v153 = vsel %vm119, %v151, 0.0
    %154 = vadd.xlane.f32.xlu0 %v153
    %v155 = vpop.xlane.xlu0 %154
    %v156 = vsel %vm119, %v152, 0.0
    %157 = vadd.xlane.f32.xlu0 %v156
    %v158 = vpop.xlane.xlu0 %157
    %v159 = vmul.f32 %v155, %v146
    %v160 = vmul.f32 %v158, %v146
    %v161 = vadd.f32 %v159, 1e-05
    %v162 = vadd.f32 %v160, 1e-05
    %v163 = vrsqrt.pop %v161
    %v164 = vrsqrt.pop %v162
    %v165 = vmul.f32 %v149, %v163
    %v166 = vmul.f32 %v150, %v164
    %v167 = vld [vmem:[%s4] sm:$0x1]
    %v169 = vlaneseq
    %v170 = vshrl.u32 %v169, 7
    %v171 = vsub.s32 0, %v170
    %v172 = vrot.slane %v167, %v171
    %v174 = vmul.f32 %v165, %v172
    %v175 = vmul.f32 %v166, %v172
    %v176 = vld [vmem:[%s5] sm:$0x1]
    %v178 = vlaneseq
    %v179 = vshrl.u32 %v178, 7
    %v180 = vsub.s32 0, %v179
    %v181 = vrot.slane %v176, %v180
    %v183 = vadd.f32 %v174, %v181
    %v184 = vadd.f32 %v175, %v181
    %185 = vst.msk [vmem:[%s6] sm:$0xff] %vm119, %v183
    %186 = vst.msk [vmem:[%s6 + $0x8] sm:$0xff] %vm119, %v184
  $region33: #{encoder_forward.19} parent=0 // pred_fallthru
    _
  // Predicated region
  $region34: #{encoder_forward.19} parent=0 // pred_check
    _
  $region35: #{encoder_forward.19} parent=0 // pred_check_branch
    %188 = sbr.rel (0) target = $region37
  $region36: #{encoder_forward.19} parent=0 // pred_region
    _
  $region37: #{encoder_forward.19} parent=0 // pred_fallthru
    _
  // Predicated region
  $region38: #{encoder_forward.19} parent=0 // pred_check
    _
  $region39: #{encoder_forward.19} parent=0 // pred_check_branch
    %190 = sbr.rel (0) target = $region41
  $region40: #{encoder_forward.19} parent=0 // pred_region
    _
  $region41: #{encoder_forward.19} parent=0 // pred_fallthru
    _

</llo_original>
